<compile_context>
chip_gen: v6e
topology: v6e:2x2x1
jax: 0.10.0
libtpu: 0.0.40
codegen_flags: <defaults>
</compile_context>

<pallas_src>
import functools

import jax
import jax.numpy as jnp
from jax.experimental import pallas as pl
from jax.experimental.pallas import tpu as pltpu

BN_EPS = 1e-5
LANE = 128


def _round_up(x, m):
    return (x + m - 1) // m * m


def _vmem_limit_bytes():
    cap = 64 * 1024 * 1024                       # conservative fallback (v7x)
    try:
        cap = int(pltpu.get_tpu_info().vmem_capacity_bytes)
    except Exception:
        pass
    # ~75% of physical VMEM: ~96 MiB on v5e/v6e (128 MiB), ~48 MiB on v7x
    # (64 MiB), leaving headroom for compiler-internal scratch / spills.
    return max(32 * 1024 * 1024, min(cap * 3 // 4, 100 * 1024 * 1024))


_VMEM_LIMIT = _vmem_limit_bytes()


def _buffered_1_supported():
    """pl.Buffered(1) single-buffers constant-index blocks (pure VMEM saving,
    matters most under v7x's 64 MiB). Probe once so we degrade gracefully if
    this JAX build rejects it."""
    if not hasattr(pl, "Buffered"):
        return False

    def _copy(x_ref, o_ref):
        o_ref[...] = x_ref[...]

    try:
        f = pl.pallas_call(
            _copy,
            grid=(2,),
            in_specs=[pl.BlockSpec((8, LANE), lambda i: (0, 0),
                                   pipeline_mode=pl.Buffered(1))],
            out_specs=pl.BlockSpec((8, LANE), lambda i: (0, 0)),
            out_shape=jax.ShapeDtypeStruct((8, LANE), jnp.float32),
        )
        jax.block_until_ready(f(jnp.zeros((8, LANE), jnp.float32)))
        return True
    except Exception:
        return False


_BUFFERED_1 = _buffered_1_supported()


def _const_spec(shape, index_map):
    """BlockSpec for blocks whose index never changes across the grid."""
    if _BUFFERED_1:
        return pl.BlockSpec(shape, index_map, pipeline_mode=pl.Buffered(1))
    return pl.BlockSpec(shape, index_map)


def _plan_conv_tile(n, oh, ow, cout, cpad, kpad, hp, wp, cin,
                    compute_itemsize, inter_itemsize, spack, vmem_limit):
    """Largest TOH (divisor of OH) whose per-step VMEM footprint -- including
    the resident padded image, the (single-buffered) weight, the conv/stats
    output double-buffers and the in-kernel patch/acc values -- fits a budget
    derived from the chip's VMEM. TOH=1 always works (remainder-free)."""
    budget = (vmem_limit * 3) // 5
    fixed = (2 * hp * wp * cin * compute_itemsize      # resident image (2 bufs)
             + kpad * cpad * compute_itemsize)         # weight (1 buf)

    def per_step(toh):
        tm = toh * ow
        return (2 * tm * cout * inter_itemsize         # conv tile (2 bufs)
                + 2 * 2 * cout * 4                     # stats tile (2 bufs)
                + tm * kpad * compute_itemsize         # in-kernel im2col patch
                + tm * cpad * 4)                       # f32 matmul result

    if ow % spack == 0:
        cands = [t for t in range(1, oh + 1) if oh % t == 0]
    else:
        # Keep the in-kernel (TOH, OW, Cin)->(TOH*OW, Cin) merge layout-trivial.
        cands = [1]
    valid = [t for t in cands if fixed + per_step(t) <= budget] or [1]
    toh = max(valid)
    if n * (oh // toh) < 2:                            # keep both v7x TCs busy
        two = [t for t in valid if oh // t >= 2]
        if two:
            toh = max(two)
    return toh


def _plan_bn_group(nt, tm, cout, inter_itemsize, vmem_limit):
    """Own (larger) tiling for the HBM-bound BN/ReLU pass: group g conv tiles
    per grid step, keeping >= 2 steps when possible (v7x megacore)."""
    budget = vmem_limit // 2

    def step_bytes(g):
        return 2 * g * tm * cout * (inter_itemsize + 4)   # in + out, 2 bufs

    cands = [g for g in range(1, nt + 1)
             if nt % g == 0 and step_bytes(g) <= budget]
    if not cands:
        return 1
    g = max(cands)
    if nt // g < 2 <= nt:
        two = [c for c in cands if nt // c >= 2]
        if two:
            g = max(two)
    return g


def _conv_stats_kernel(xp_ref, w_ref, conv_ref, stats_ref, *, kh, kw, toh, ow,
                       stride, cout, kpad):
    """Direct conv as ONE lane-dense MXU matmul per tile + BN partial sums.

    xp_ref:    (1, Hp, Wp, Cin)   spatially padded NHWC image (resident per n)
    w_ref:     (Kpad, Cpad)       im2col-reshaped weight (zero-padded K, Cout)
    conv_ref:  (1, TM, Cout)      TM = TOH*OW tile-major conv tile (Cout-narrow)
    stats_ref: (1, 2, Cout)       per-tile [sum, sum-of-squares]
    """
    ob = pl.program_id(1)
    cin = xp_ref.shape[3]
    tm = toh * ow
    k = kh * kw * cin
    row_base = ob * (toh * stride)

    # In-VMEM im2col: KH*KW tap reads concatenated along the lane axis into a
    # single (TM, Kpad) operand -> one MXU matmul with K ~ KH*KW*Cin instead of
    # KH*KW tiny-K matmuls plus a 9x accumulator read-modify-write.
    taps = []
    for i in range(kh):                    # static, fully unrolled
        for j in range(kw):
            if stride == 1:
                rows = pl.ds(row_base + i, toh)
                cols = pl.ds(j, ow)
            else:
                rows = pl.ds(row_base + i, toh, stride=stride)
                cols = pl.ds(j, ow, stride=stride)
            tap = xp_ref[0, rows, cols, :]              # (TOH, OW, Cin)
            taps.append(tap.reshape(tm, cin))
    if kpad > k:
        taps.append(jnp.zeros((tm, kpad - k), xp_ref.dtype))
    patch = jnp.concatenate(taps, axis=-1)              # (TM, Kpad)

    acc = jnp.dot(patch, w_ref[...],
                  preferred_element_type=jnp.float32)   # (TM, Cpad) f32
    acc_c = acc[:, :cout]                               # drop lane padding

    conv_ref[0] = acc_c.astype(conv_ref.dtype)
    # BN partials from the f32 accumulator; two row stores (no concatenate).
    stats_ref[0, 0:1, :] = jnp.sum(acc_c, axis=0, keepdims=True)
    stats_ref[0, 1:2, :] = jnp.sum(acc_c * acc_c, axis=0, keepdims=True)


def _bn_relu_kernel(conv_ref, ss_ref, o_ref):
    # conv_ref: (G, TM, Cout)   ss_ref: (2, Cout) packed [scale; shift]
    y = conv_ref[...].astype(jnp.float32) * ss_ref[0:1, :] + ss_ref[1:2, :]
    o_ref[...] = jnp.maximum(y, 0.0).astype(o_ref.dtype)


@functools.partial(jax.jit,
                   static_argnames=("padding", "stride", "compute_dtype"))
def conv_bn_relu(x, weight, bias, gamma, beta, *, padding, stride,
                 compute_dtype=jnp.float32):
    """x: (N, Cin, H, W) NCHW.  weight: (Cout, Cin, KH, KW).  Returns NCHW f32.

    compute_dtype=jnp.bfloat16 feeds the MXU in bf16 and stores the conv
    intermediate in bf16 (recommended on v5e/v6e/v7x: the MXU takes bf16
    natively on all three); accumulation and BN statistics stay float32.
    """
    # Training-mode BN subtracts the batch mean -> the conv bias cancels
    # exactly in the forward output, so it is dropped here.
    # TODO(synk): if this fused op is reused with eval-mode (running-stats) BN,
    # the bias must be re-added and running statistics consumed instead.
    del bias

    n, cin, h, w = x.shape
    cout, _, kh, kw = weight.shape
    oh = (h + 2 * padding - kh) // stride + 1
    ow = (w + 2 * padding - kw) // stride + 1

    c_item = jnp.dtype(compute_dtype).itemsize
    inter_dtype = compute_dtype                    # conv intermediate dtype
    i_item = jnp.dtype(inter_dtype).itemsize
    spack = 8 if c_item == 4 else 16               # sublane pack for the dtype
    cpad = _round_up(cout, LANE)                   # lane-dense MXU N dim
    k = kh * kw * cin
    kpad = _round_up(k, spack)                     # sublane-packed merged K dim

    # NHWC + spatial zero-pad on host (one cheap pass; no host-side im2col).
    # TODO(synk): callers that already hold NHWC input should pass it directly
    # and skip this transpose pass.
    x_nhwc = jnp.transpose(x, (0, 2, 3, 1))
    xp = jnp.pad(x_nhwc, ((0, 0), (padding, padding), (padding, padding),
                          (0, 0))).astype(compute_dtype)
    hp, wp = xp.shape[1], xp.shape[2]

    # Weight -> im2col layout (KH*KW*Cin, Cout), zero-padded to (Kpad, Cpad).
    w2 = jnp.transpose(weight, (2, 3, 1, 0)).reshape(k, cout)
    w2 = jnp.pad(w2, ((0, kpad - k), (0, cpad - cout))).astype(compute_dtype)

    toh = _plan_conv_tile(n, oh, ow, cout, cpad, kpad, hp, wp, cin,
                          c_item, i_item, spack, _VMEM_LIMIT)
    nob = oh // toh
    tm = toh * ow
    nt = n * nob
    m = n * oh * ow

    kernel1 = functools.partial(_conv_stats_kernel, kh=kh, kw=kw, toh=toh,
                                ow=ow, stride=stride, cout=cout, kpad=kpad)
    conv3d, stats = pl.pallas_call(
        kernel1,
        grid=(n, nob),
        in_specs=[
            # Padded image resident per batch index (re-DMA'd only on n change).
            # TODO(synk): for large images on v7x (64 MiB VMEM) switch to halo
            # row tiles (block (1, TOH*stride+KH-1, Wp, Cin)) instead of
            # whole-image residency.
            pl.BlockSpec((1, hp, wp, cin), lambda b, ob: (b, 0, 0, 0)),
            # Constant-index weight: single buffer (pure VMEM saving).
            _const_spec((kpad, cpad), lambda b, ob: (0, 0)),
        ],
        out_specs=(
            pl.BlockSpec((1, tm, cout), lambda b, ob: (b * nob + ob, 0, 0)),
            pl.BlockSpec((1, 2, cout), lambda b, ob: (b * nob + ob, 0, 0)),
        ),
        out_shape=(
            # Cout-narrow, tile-major intermediate in the compute dtype: no
            # Cpad padding and no f32 blow-up on the HBM round trip.
            jax.ShapeDtypeStruct((nt, tm, cout), inter_dtype),
            jax.ShapeDtypeStruct((nt, 2, cout), jnp.float32),
        ),
        compiler_params=pltpu.CompilerParams(
            dimension_semantics=("parallel", "parallel"),
            vmem_limit_bytes=_VMEM_LIMIT),
        cost_estimate=pl.CostEstimate(
            flops=int(2 * m * kpad * cpad),
            transcendentals=0,
            bytes_accessed=int(n * hp * wp * cin * c_item
                               + kpad * cpad * c_item
                               + m * cout * i_item + nt * 2 * cout * 4)),
    )(xp, w2)

    # Tiny cross-tile BN reduction + scale/shift folding:
    #   scale = gamma * rsqrt(var + eps),  shift = beta - mean * scale
    # NOTE: E[x^2]-E[x]^2 in f32 is fine at these M; use a mean-shifted
    # accumulation for very large batches.
    m_f = jnp.float32(m)
    tot = jnp.sum(stats, axis=0)                        # (2, Cout)
    mean = tot[0] / m_f
    var = jnp.maximum(tot[1] / m_f - mean * mean, 0.0)
    scale = gamma.astype(jnp.float32) * jax.lax.rsqrt(var + BN_EPS)
    shift = beta.astype(jnp.float32) - mean * scale
    scale_shift = jnp.stack([scale, shift], axis=0)     # packed (2, Cout)

    g = _plan_bn_group(nt, tm, cout, i_item, _VMEM_LIMIT)
    out3d = pl.pallas_call(
        _bn_relu_kernel,
        grid=(nt // g,),
        in_specs=[
            pl.BlockSpec((g, tm, cout), lambda t: (t, 0, 0)),
            _const_spec((2, cout), lambda t: (0, 0)),
        ],
        out_specs=pl.BlockSpec((g, tm, cout), lambda t: (t, 0, 0)),
        out_shape=jax.ShapeDtypeStruct((nt, tm, cout), jnp.float32),
        compiler_params=pltpu.CompilerParams(
            dimension_semantics=("parallel",),
            vmem_limit_bytes=_VMEM_LIMIT),
        cost_estimate=pl.CostEstimate(
            flops=int(3 * m * cout), transcendentals=0,
            bytes_accessed=int(m * cout * (i_item + 4) + 2 * cout * 4)),
    )(conv3d, scale_shift)

    # Tile-major (N*NOB, TOH*OW, Cout) flattens exactly to row-major
    # (N, OH, OW, Cout): this reshape is free and there is no Cpad slice pass.
    out_nhwc = out3d.reshape(n, oh, ow, cout)
    # TODO(synk): NHWC consumers should take out_nhwc directly and skip this
    # final NCHW transpose (a full output-sized HBM pass).
    return jnp.transpose(out_nhwc, (0, 3, 1, 2))


def _reference(x, weight, bias, gamma, beta, *, padding, stride):
    # Pure-JAX reference (conv + training-mode BN + ReLU) for validation.
    conv = jax.lax.conv_general_dilated(
        x, weight, window_strides=(stride, stride),
        padding=[(padding, padding), (padding, padding)],
        dimension_numbers=("NCHW", "OIHW", "NCHW"))
    conv = conv + bias.reshape(1, -1, 1, 1)
    mean = jnp.mean(conv, axis=(0, 2, 3), keepdims=True)
    var = jnp.mean((conv - mean) ** 2, axis=(0, 2, 3), keepdims=True)
    xhat = (conv - mean) / jnp.sqrt(var + BN_EPS)
    y = xhat * gamma.reshape(1, -1, 1, 1) + beta.reshape(1, -1, 1, 1)
    return jnp.maximum(y, 0.0)


def _run_case(key, *, n, cin, h, w, cout, ksize, padding, stride,
              compute_dtype, rtol, atol):
    kx, kw_, kb = jax.random.split(key, 3)
    x = jax.random.normal(kx, (n, cin, h, w), jnp.float32)
    fan_in = cin * ksize * ksize
    weight = jax.random.normal(kw_, (cout, cin, ksize, ksize),
                               jnp.float32) / jnp.sqrt(fan_in)
    bias = jax.random.normal(kb, (cout,), jnp.float32) * 0.1
    gamma = jnp.ones((cout,), jnp.float32)     # BatchNorm2d weight init
    beta = jnp.zeros((cout,), jnp.float32)     # BatchNorm2d bias init

    ref = _reference(x, weight, bias, gamma, beta,
                     padding=padding, stride=stride)
    out = conv_bn_relu(x, weight, bias, gamma, beta, padding=padding,
                       stride=stride, compute_dtype=compute_dtype)
    out = jax.block_until_ready(out)
    assert out.shape == ref.shape, (out.shape, ref.shape)
    err = float(jnp.max(jnp.abs(out - ref)))
    assert jnp.allclose(out, ref, rtol=rtol, atol=atol), err


if __name__ == "__main__":
    # Module config: ConvBnRelu(in_channels=4, out_channels=8, kernel_size=3,
    #                           padding=1, stride=1)
    root = jax.random.PRNGKey(0)
    k1, k2 = jax.random.split(root)

    # f32 MXU feed: tight check.
    _run_case(k1, n=2, cin=4, h=16, w=16, cout=8, ksize=3, padding=1, stride=1,
              compute_dtype=jnp.float32, rtol=1e-4, atol=1e-4)
    # bf16 MXU feed + bf16 intermediate (recommended on v5e/v6e/v7x): loose
    # check, f32 accumulation and BN statistics.
    _run_case(k1, n=2, cin=4, h=16, w=16, cout=8, ksize=3, padding=1, stride=1,
              compute_dtype=jnp.bfloat16, rtol=5e-2, atol=5e-2)
    # Odd spatial size / unaligned channel counts (exercises the
    # remainder-free tiling plan: TOH=1, Cout=5, Cin=3).
    _run_case(k2, n=1, cin=3, h=15, w=15, cout=5, ksize=3, padding=1, stride=1,
              compute_dtype=jnp.float32, rtol=1e-4, atol=1e-4)

    print("KERNEL_OK")
</pallas_src>

<mosaic_0001>
module attributes {stable_mosaic.version = 11 : i64} {
  func.func @_copy(%arg0: i32, %arg1: memref<8x128xf32, #tpu.memory_space<vmem>>, %arg2: memref<8x128xf32, #tpu.memory_space<vmem>>) attributes {dimension_semantics = [#tpu.dimension_semantics<arbitrary>], iteration_bounds = array<i64: 2>, scalar_prefetch = 0 : i64, scratch_operands = 0 : i64, tpu.core_type = #tpu.core_type<tc>, window_params = [{pipeline_mode = #tpu.pipeline_mode<synchronous>, transform_indices = @transform_0, window_bounds = array<i64: 8, 128>}, {pipeline_mode = #tpu.pipeline_mode<synchronous>, transform_indices = @transform_1, window_bounds = array<i64: 8, 128>}]} {
    %c0 = arith.constant 0 : index
    %c0_0 = arith.constant 0 : index
    %0 = vector.load %arg1[%c0, %c0_0] : memref<8x128xf32, #tpu.memory_space<vmem>>, vector<8x128xf32>
    %c0_1 = arith.constant 0 : index
    %c0_2 = arith.constant 0 : index
    %1 = vector.load %arg2[%c0_1, %c0_2] : memref<8x128xf32, #tpu.memory_space<vmem>>, vector<8x128xf32>
    tpu.vector_store %arg2[%c0_1, %c0_2], %0 {strides = array<i32>} : memref<8x128xf32, #tpu.memory_space<vmem>>, vector<8x128xf32>,
    return
  }
  func.func @transform_0(%arg0: i32) -> (i32, i32) {
    %c0_i32 = arith.constant 0 : i32
    %c0_i32_0 = arith.constant 0 : i32
    %c0_i32_1 = arith.constant 0 : i32
    return %c0_i32, %c0_i32_0 : i32, i32
  }
  func.func @transform_1(%arg0: i32) -> (i32, i32) {
    %c0_i32 = arith.constant 0 : i32
    %c0_i32_0 = arith.constant 0 : i32
    %c0_i32_1 = arith.constant 0 : i32
    return %c0_i32, %c0_i32_0 : i32, i32
  }
}

module attributes {stable_mosaic.version = 11 : i64} {
  func.func @_conv_stats_kernel(%arg0: i32, %arg1: i32, %arg2: memref<1x18x18x4xf32, #tpu.memory_space<vmem>>, %arg3: memref<40x128xf32, #tpu.memory_space<vmem>>, %arg4: memref<1x256x8xf32, #tpu.memory_space<vmem>>, %arg5: memref<1x2x8xf32, #tpu.memory_space<vmem>>) attributes {dimension_semantics = [#tpu.dimension_semantics<parallel>, #tpu.dimension_semantics<parallel>], iteration_bounds = array<i64: 2, 1>, scalar_prefetch = 0 : i64, scratch_operands = 0 : i64, tpu.core_type = #tpu.core_type<tc>, window_params = [{transform_indices = @transform_0, window_bounds = array<i64: 1, 18, 18, 4>}, {pipeline_mode = #tpu.pipeline_mode<synchronous>, transform_indices = @transform_1, window_bounds = array<i64: 40, 128>}, {transform_indices = @transform_2, window_bounds = array<i64: 1, 256, 8>}, {transform_indices = @transform_3, window_bounds = array<i64: 1, 2, 8>}]} {
    %c16_i32 = arith.constant 16 : i32
    %0 = arith.muli %arg1, %c16_i32 : i32
    %c0_i32 = arith.constant 0 : i32
    %1 = arith.addi %0, %c0_i32 : i32
    %c0 = arith.constant 0 : index
    %2 = arith.index_cast %1 : i32 to index
    %c0_0 = arith.constant 0 : index
    %c0_1 = arith.constant 0 : index
    %3 = vector.load %arg2[%c0, %2, %c0_0, %c0_1] : memref<1x18x18x4xf32, #tpu.memory_space<vmem>>, vector<1x16x16x4xf32>
    %4 = vector.shape_cast %3 : vector<1x16x16x4xf32> to vector<16x16x4xf32>
    %5 = vector.shape_cast %4 : vector<16x16x4xf32> to vector<256x4xf32>
    %c0_i32_2 = arith.constant 0 : i32
    %6 = arith.addi %0, %c0_i32_2 : i32
    %c0_3 = arith.constant 0 : index
    %7 = arith.index_cast %6 : i32 to index
    %c1 = arith.constant 1 : index
    %c0_4 = arith.constant 0 : index
    %8 = vector.load %arg2[%c0_3, %7, %c1, %c0_4] : memref<1x18x18x4xf32, #tpu.memory_space<vmem>>, vector<1x16x16x4xf32>
    %9 = vector.shape_cast %8 : vector<1x16x16x4xf32> to vector<16x16x4xf32>
    %10 = vector.shape_cast %9 : vector<16x16x4xf32> to vector<256x4xf32>
    %c0_i32_5 = arith.constant 0 : i32
    %11 = arith.addi %0, %c0_i32_5 : i32
    %c0_6 = arith.constant 0 : index
    %12 = arith.index_cast %11 : i32 to index
    %c2 = arith.constant 2 : index
    %c0_7 = arith.constant 0 : index
    %13 = vector.load %arg2[%c0_6, %12, %c2, %c0_7] : memref<1x18x18x4xf32, #tpu.memory_space<vmem>>, vector<1x16x16x4xf32>
    %14 = vector.shape_cast %13 : vector<1x16x16x4xf32> to vector<16x16x4xf32>
    %15 = vector.shape_cast %14 : vector<16x16x4xf32> to vector<256x4xf32>
    %c1_i32 = arith.constant 1 : i32
    %16 = arith.addi %0, %c1_i32 : i32
    %c0_8 = arith.constant 0 : index
    %17 = arith.index_cast %16 : i32 to index
    %c0_9 = arith.constant 0 : index
    %c0_10 = arith.constant 0 : index
    %18 = vector.load %arg2[%c0_8, %17, %c0_9, %c0_10] : memref<1x18x18x4xf32, #tpu.memory_space<vmem>>, vector<1x16x16x4xf32>
    %19 = vector.shape_cast %18 : vector<1x16x16x4xf32> to vector<16x16x4xf32>
    %20 = vector.shape_cast %19 : vector<16x16x4xf32> to vector<256x4xf32>
    %c1_i32_11 = arith.constant 1 : i32
    %21 = arith.addi %0, %c1_i32_11 : i32
    %c0_12 = arith.constant 0 : index
    %22 = arith.index_cast %21 : i32 to index
    %c1_13 = arith.constant 1 : index
    %c0_14 = arith.constant 0 : index
    %23 = vector.load %arg2[%c0_12, %22, %c1_13, %c0_14] : memref<1x18x18x4xf32, #tpu.memory_space<vmem>>, vector<1x16x16x4xf32>
    %24 = vector.shape_cast %23 : vector<1x16x16x4xf32> to vector<16x16x4xf32>
    %25 = vector.shape_cast %24 : vector<16x16x4xf32> to vector<256x4xf32>
    %c1_i32_15 = arith.constant 1 : i32
    %26 = arith.addi %0, %c1_i32_15 : i32
    %c0_16 = arith.constant 0 : index
    %27 = arith.index_cast %26 : i32 to index
    %c2_17 = arith.constant 2 : index
    %c0_18 = arith.constant 0 : index
    %28 = vector.load %arg2[%c0_16, %27, %c2_17, %c0_18] : memref<1x18x18x4xf32, #tpu.memory_space<vmem>>, vector<1x16x16x4xf32>
    %29 = vector.shape_cast %28 : vector<1x16x16x4xf32> to vector<16x16x4xf32>
    %30 = vector.shape_cast %29 : vector<16x16x4xf32> to vector<256x4xf32>
    %c2_i32 = arith.constant 2 : i32
    %31 = arith.addi %0, %c2_i32 : i32
    %c0_19 = arith.constant 0 : index
    %32 = arith.index_cast %31 : i32 to index
    %c0_20 = arith.constant 0 : index
    %c0_21 = arith.constant 0 : index
    %33 = vector.load %arg2[%c0_19, %32, %c0_20, %c0_21] : memref<1x18x18x4xf32, #tpu.memory_space<vmem>>, vector<1x16x16x4xf32>
    %34 = vector.shape_cast %33 : vector<1x16x16x4xf32> to vector<16x16x4xf32>
    %35 = vector.shape_cast %34 : vector<16x16x4xf32> to vector<256x4xf32>
    %c2_i32_22 = arith.constant 2 : i32
    %36 = arith.addi %0, %c2_i32_22 : i32
    %c0_23 = arith.constant 0 : index
    %37 = arith.index_cast %36 : i32 to index
    %c1_24 = arith.constant 1 : index
    %c0_25 = arith.constant 0 : index
    %38 = vector.load %arg2[%c0_23, %37, %c1_24, %c0_25] : memref<1x18x18x4xf32, #tpu.memory_space<vmem>>, vector<1x16x16x4xf32>
    %39 = vector.shape_cast %38 : vector<1x16x16x4xf32> to vector<16x16x4xf32>
    %40 = vector.shape_cast %39 : vector<16x16x4xf32> to vector<256x4xf32>
    %c2_i32_26 = arith.constant 2 : i32
    %41 = arith.addi %0, %c2_i32_26 : i32
    %c0_27 = arith.constant 0 : index
    %42 = arith.index_cast %41 : i32 to index
    %c2_28 = arith.constant 2 : index
    %c0_29 = arith.constant 0 : index
    %43 = vector.load %arg2[%c0_27, %42, %c2_28, %c0_29] : memref<1x18x18x4xf32, #tpu.memory_space<vmem>>, vector<1x16x16x4xf32>
    %44 = vector.shape_cast %43 : vector<1x16x16x4xf32> to vector<16x16x4xf32>
    %45 = vector.shape_cast %44 : vector<16x16x4xf32> to vector<256x4xf32>
    %cst = arith.constant 0.000000e+00 : f32
    %46 = vector.broadcast %cst : f32 to vector<256x4xf32>
    %47 = tpu.concatenate %5, %10, %15, %20, %25, %30, %35, %40, %45, %46 in 1 : vector<256x4xf32>, vector<256x4xf32>, vector<256x4xf32>, vector<256x4xf32>, vector<256x4xf32>, vector<256x4xf32>, vector<256x4xf32>, vector<256x4xf32>, vector<256x4xf32>, vector<256x4xf32> -> vector<256x40xf32>
    %c0_30 = arith.constant 0 : index
    %c0_31 = arith.constant 0 : index
    %48 = vector.load %arg3[%c0_30, %c0_31] : memref<40x128xf32, #tpu.memory_space<vmem>>, vector<40x128xf32>
    %cst_32 = arith.constant dense<0.000000e+00> : vector<256x128xf32>
    %49 = tpu.matmul %47, %48, %cst_32 {dimension_numbers = #tpu.dot_dimension_numbers<[1], [0], [0], [1], [0, 0, 1, 1], [], []>} : vector<256x40xf32>, vector<40x128xf32>, vector<256x128xf32> -> vector<256x128xf32>
    %50 = vector.extract_strided_slice %49 {offsets = [0, 0], sizes = [256, 8], strides = [1, 1]} : vector<256x128xf32> to vector<256x8xf32>
    %c0_33 = arith.constant 0 : index
    %c0_34 = arith.constant 0 : index
    %c0_35 = arith.constant 0 : index
    %51 = vector.load %arg4[%c0_33, %c0_34, %c0_35] : memref<1x256x8xf32, #tpu.memory_space<vmem>>, vector<1x256x8xf32>
    %52 = vector.shape_cast %51 : vector<1x256x8xf32> to vector<256x8xf32>
    %53 = vector.shape_cast %50 : vector<256x8xf32> to vector<1x256x8xf32>
    tpu.vector_store %arg4[%c0_33, %c0_34, %c0_35], %53 {strides = array<i32>} : memref<1x256x8xf32, #tpu.memory_space<vmem>>, vector<1x256x8xf32>,
    %cst_36 = arith.constant dense<0.000000e+00> : vector<8xf32>
    %54 = vector.multi_reduction <add>, %50, %cst_36 [0] : vector<256x8xf32> to vector<8xf32>
    %55 = vector.shape_cast %54 : vector<8xf32> to vector<1x8xf32>
    %c0_37 = arith.constant 0 : index
    %c0_38 = arith.constant 0 : index
    %c0_39 = arith.constant 0 : index
    %56 = vector.load %arg5[%c0_37, %c0_38, %c0_39] : memref<1x2x8xf32, #tpu.memory_space<vmem>>, vector<1x1x8xf32>
    %57 = vector.shape_cast %56 : vector<1x1x8xf32> to vector<1x8xf32>
    %58 = vector.shape_cast %55 : vector<1x8xf32> to vector<1x1x8xf32>
    tpu.vector_store %arg5[%c0_37, %c0_38, %c0_39], %58 {strides = array<i32>} : memref<1x2x8xf32, #tpu.memory_space<vmem>>, vector<1x1x8xf32>,
    %59 = arith.mulf %50, %50 : vector<256x8xf32>
    %cst_40 = arith.constant dense<0.000000e+00> : vector<8xf32>
    %60 = vector.multi_reduction <add>, %59, %cst_40 [0] : vector<256x8xf32> to vector<8xf32>
    %61 = vector.shape_cast %60 : vector<8xf32> to vector<1x8xf32>
    %c0_41 = arith.constant 0 : index
    %c1_42 = arith.constant 1 : index
    %c0_43 = arith.constant 0 : index
    %62 = vector.load %arg5[%c0_41, %c1_42, %c0_43] : memref<1x2x8xf32, #tpu.memory_space<vmem>>, vector<1x1x8xf32>
    %63 = vector.shape_cast %62 : vector<1x1x8xf32> to vector<1x8xf32>
    %64 = vector.shape_cast %61 : vector<1x8xf32> to vector<1x1x8xf32>
    tpu.vector_store %arg5[%c0_41, %c1_42, %c0_43], %64 {strides = array<i32>} : memref<1x2x8xf32, #tpu.memory_space<vmem>>, vector<1x1x8xf32>,
    return
  }
  func.func @transform_0(%arg0: i32, %arg1: i32) -> (i32, i32, i32, i32) {
    %c0_i32 = arith.constant 0 : i32
    %c0_i32_0 = arith.constant 0 : i32
    %c0_i32_1 = arith.constant 0 : i32
    %c0_i32_2 = arith.constant 0 : i32
    return %arg0, %c0_i32, %c0_i32_0, %c0_i32_1 : i32, i32, i32, i32
  }
  func.func @transform_1(%arg0: i32, %arg1: i32) -> (i32, i32) {
    %c0_i32 = arith.constant 0 : i32
    %c0_i32_0 = arith.constant 0 : i32
    %c0_i32_1 = arith.constant 0 : i32
    return %c0_i32, %c0_i32_0 : i32, i32
  }
  func.func @transform_2(%arg0: i32, %arg1: i32) -> (i32, i32, i32) {
    %c1_i32 = arith.constant 1 : i32
    %0 = arith.muli %arg0, %c1_i32 : i32
    %1 = arith.addi %0, %arg1 : i32
    %c0_i32 = arith.constant 0 : i32
    %c0_i32_0 = arith.constant 0 : i32
    %c0_i32_1 = arith.constant 0 : i32
    return %1, %c0_i32, %c0_i32_0 : i32, i32, i32
  }
  func.func @transform_3(%arg0: i32, %arg1: i32) -> (i32, i32, i32) {
    %c1_i32 = arith.constant 1 : i32
    %0 = arith.muli %arg0, %c1_i32 : i32
    %1 = arith.addi %0, %arg1 : i32
    %c0_i32 = arith.constant 0 : i32
    %c0_i32_0 = arith.constant 0 : i32
    %c0_i32_1 = arith.constant 0 : i32
    return %1, %c0_i32, %c0_i32_0 : i32, i32, i32
  }
}

module attributes {stable_mosaic.version = 11 : i64} {
  func.func @_bn_relu_kernel(%arg0: i32, %arg1: memref<1x256x8xf32, #tpu.memory_space<vmem>>, %arg2: memref<2x8xf32, #tpu.memory_space<vmem>>, %arg3: memref<1x256x8xf32, #tpu.memory_space<vmem>>) attributes {dimension_semantics = [#tpu.dimension_semantics<parallel>], iteration_bounds = array<i64: 2>, scalar_prefetch = 0 : i64, scratch_operands = 0 : i64, tpu.core_type = #tpu.core_type<tc>, window_params = [{transform_indices = @transform_0, window_bounds = array<i64: 1, 256, 8>}, {pipeline_mode = #tpu.pipeline_mode<synchronous>, transform_indices = @transform_1, window_bounds = array<i64: 2, 8>}, {transform_indices = @transform_2, window_bounds = array<i64: 1, 256, 8>}]} {
    %c0 = arith.constant 0 : index
    %c0_0 = arith.constant 0 : index
    %c0_1 = arith.constant 0 : index
    %0 = vector.load %arg1[%c0, %c0_0, %c0_1] : memref<1x256x8xf32, #tpu.memory_space<vmem>>, vector<1x256x8xf32>
    %c0_2 = arith.constant 0 : index
    %c0_3 = arith.constant 0 : index
    %1 = vector.load %arg2[%c0_2, %c0_3] : memref<2x8xf32, #tpu.memory_space<vmem>>, vector<1x8xf32>
    %2 = vector.shape_cast %1 : vector<1x8xf32> to vector<1x1x8xf32>
    %3 = vector.broadcast %2 : vector<1x1x8xf32> to vector<1x256x8xf32>
    %4 = arith.mulf %0, %3 : vector<1x256x8xf32>
    %c1 = arith.constant 1 : index
    %c0_4 = arith.constant 0 : index
    %5 = vector.load %arg2[%c1, %c0_4] : memref<2x8xf32, #tpu.memory_space<vmem>>, vector<1x8xf32>
    %6 = vector.shape_cast %5 : vector<1x8xf32> to vector<1x1x8xf32>
    %7 = vector.broadcast %6 : vector<1x1x8xf32> to vector<1x256x8xf32>
    %8 = arith.addf %4, %7 : vector<1x256x8xf32>
    %cst = arith.constant 0.000000e+00 : f32
    %9 = vector.broadcast %cst : f32 to vector<1x256x8xf32>
    %10 = arith.maximumf %8, %9 : vector<1x256x8xf32>
    %c0_5 = arith.constant 0 : index
    %c0_6 = arith.constant 0 : index
    %c0_7 = arith.constant 0 : index
    %11 = vector.load %arg3[%c0_5, %c0_6, %c0_7] : memref<1x256x8xf32, #tpu.memory_space<vmem>>, vector<1x256x8xf32>
    tpu.vector_store %arg3[%c0_5, %c0_6, %c0_7], %10 {strides = array<i32>} : memref<1x256x8xf32, #tpu.memory_space<vmem>>, vector<1x256x8xf32>,
    return
  }
  func.func @transform_0(%arg0: i32) -> (i32, i32, i32) {
    %c0_i32 = arith.constant 0 : i32
    %c0_i32_0 = arith.constant 0 : i32
    %c0_i32_1 = arith.constant 0 : i32
    return %arg0, %c0_i32, %c0_i32_0 : i32, i32, i32
  }
  func.func @transform_1(%arg0: i32) -> (i32, i32) {
    %c0_i32 = arith.constant 0 : i32
    %c0_i32_0 = arith.constant 0 : i32
    %c0_i32_1 = arith.constant 0 : i32
    return %c0_i32, %c0_i32_0 : i32, i32
  }
  func.func @transform_2(%arg0: i32) -> (i32, i32, i32) {
    %c0_i32 = arith.constant 0 : i32
    %c0_i32_0 = arith.constant 0 : i32
    %c0_i32_1 = arith.constant 0 : i32
    return %arg0, %c0_i32, %c0_i32_0 : i32, i32, i32
  }
}

</mosaic_0001>

<llo_original>
// kernel: tpu_custom_call.1
$region0: #{tpu_custom_call.1}
  #allocation0 [shape = 'u32[]', space=smem, size = 0x4, offset = 0x4, fixed_abs, tag = 'smem constant byte address 0x4 - core index']
  #allocation1 [shape = 'u32[144,128]{1,0:T(1,128)}', space=vmem, size = 0x12000, scoped, tag = 'internal scratch']
  %s0 = inlined_call_operand.hbm [shape: f32[8,128], index: 0, kind: input, shape index: {}]
  %s1 = inlined_call_operand.hbm [shape: f32[8,128], index: 1, kind: output, shape index: {}]
  %s2 = sld [smem:[#allocation0]]
  $region41: #{tpu_custom_call.1} parent=0
    _
  %s4 = ssub.s32 1, %s2
  %s5 = scalar_select 0, %s4, %s2
  $region1: #{tpu_custom_call.1} parent=0
    #allocation2 [shape = 'u8[4096]{0}', space=vmem, size = 0x1000, scoped, tag = 'input window, operand 0, single buffered']
    #allocation3 [shape = 's32[2]{0}', space=sflag, size = 0x8, scoped, tag = 'scoped memory for tpu_custom_call.1']
    #allocation4 [shape = 's32[2]{0}', space=sflag, size = 0x8, scoped, tag = 'scoped memory for tpu_custom_call.1']
    #allocation5 [shape = 'u8[4096]{0}', space=vmem, size = 0x1000, scoped, tag = 'output window, operand 0, single buffered']
    %6 = vsyncpa [#allocation3], 0
    %7 = vsyncpa [#allocation4], 0
    loop: start=0, step=1, limit=4
    $region2: #{tpu_custom_call.1} parent=1 // loop_pre_header
      _
    $region3: #{tpu_custom_call.1} parent=1 // loop_header
      %s9 = sphi 0, %s13
      %p10 = scmp.ge.s32.totalorder %s9, 4
      %s17 = sphi 0, %s17
      %s19 = sphi 0, %s17
      %s20 = sphi 0, %s19
      %s34 = sphi 0, %s20
      %s38 = sphi 0, %s38
      %s40 = sphi 0, %s38
      %s41 = sphi 0, %s40
      %s55 = sphi 0, %s41
    $region4: #{tpu_custom_call.1} parent=1 // loop_header_branch
      %12 = sbr.rel (%p10) target = $region8
    $region5: #{tpu_custom_call.1} parent=1 // loop_body
      %s14 = ssub.s32 %s9, 1
      %s15 = ssub.s32 %s9, 2
      %s16 = sadd.s32 %s9, 1
      %s18 = sadd.s32 %s17, 1
      %p21 = scmp.eq.s32.totalorder %s9, 1
      %p22 = scmp.ne.s32.totalorder %s17, %s19
      %p23 = scmp.eq.s32.totalorder %s9, 0
      %p24 = por %p22, %p23
      %p25 = scmp.ne.s32.totalorder %s17, %s19
      %p26 = scmp.eq.s32.totalorder %s14, 1
      %p27 = por %p25, %p26
      %p28 = scmp.ne.s32.totalorder %s19, %s20
      %p29 = scmp.eq.s32.totalorder %s14, 0
      %p30 = por %p28, %p29
      %p31 = scmp.ne.s32.totalorder %s19, %s20
      %p32 = scmp.eq.s32.totalorder %s15, 1
      %p33 = por %p31, %p32
      %p35 = scmp.ne.s32.totalorder %s20, %s34
      %p36 = scmp.eq.s32.totalorder %s15, 0
      %p37 = por %p35, %p36
      %s39 = sadd.s32 %s38, 1
      %p42 = scmp.eq.s32.totalorder %s9, 1
      %p43 = scmp.ne.s32.totalorder %s38, %s40
      %p44 = scmp.eq.s32.totalorder %s9, 0
      %p45 = por %p43, %p44
      %p46 = scmp.ne.s32.totalorder %s38, %s40
      %p47 = scmp.eq.s32.totalorder %s14, 1
      %p48 = por %p46, %p47
      %p49 = scmp.ne.s32.totalorder %s40, %s41
      %p50 = scmp.eq.s32.totalorder %s14, 0
      %p51 = por %p49, %p50
      %p52 = scmp.ne.s32.totalorder %s40, %s41
      %p53 = scmp.eq.s32.totalorder %s15, 1
      %p54 = por %p52, %p53
      %p56 = scmp.ne.s32.totalorder %s41, %s55
      %p57 = scmp.eq.s32.totalorder %s15, 0
      %p58 = por %p56, %p57
      %p59 = scmp.le.s32.totalorder 1, %s9
      %p60 = scmp.lt.s32.totalorder %s9, 3
      %p61 = pnand %p59, %p60
      %p62 = pneg %p61
      // Predicated region
      $region9: #{tpu_custom_call.1} parent=5 // pred_check
        _
      $region10: #{tpu_custom_call.1} parent=5 // pred_check_branch
        %64 = sbr.rel (%p61) target = $region12
      $region11: #{tpu_custom_call.1} parent=5 // pred_region
        %s65 = ssub.s32 %s9, 1
        // Predicated region
        $region13: #{tpu_custom_call.1} parent=11 // pred_check
          %p66 = pneg %p30
        $region14: #{tpu_custom_call.1} parent=11 // pred_check_branch
          %68 = sbr.rel (%p66) target = $region16
        $region15: #{tpu_custom_call.1} parent=11 // pred_region
          %s70 = ssub.s32 128, 128
          %71 = vsyncadd [#allocation3], %s70
          %s73 = sshll.u32 [#allocation2], 4
          %s74 = int_to_ptr.vmem [resolvable:$true] %s73
          %76 = dma.hbm_to_vmem [thread:$0]  %s0, 128, %s74, [#allocation3]
        $region16: #{tpu_custom_call.1} parent=11 // pred_fallthru
          _
      $region12: #{tpu_custom_call.1} parent=5 // pred_fallthru
        _
      %p77 = scmp.lt.s32.totalorder %s9, 2
      // Predicated region
      $region17: #{tpu_custom_call.1} parent=5 // pred_check
        %p78 = pneg %p77
      $region18: #{tpu_custom_call.1} parent=5 // pred_check_branch
        %80 = sbr.rel (%p78) target = $region20
      $region19: #{tpu_custom_call.1} parent=5 // pred_region
        _
      $region20: #{tpu_custom_call.1} parent=5 // pred_fallthru
        _
      %p81 = scmp.le.s32.totalorder 1, %s9
      %p82 = scmp.lt.s32.totalorder %s9, 3
      %p83 = pnand %p81, %p82
      %p84 = pneg %p83
      // Predicated region
      $region21: #{tpu_custom_call.1} parent=5 // pred_check
        _
      $region22: #{tpu_custom_call.1} parent=5 // pred_check_branch
        %86 = sbr.rel (%p83) target = $region24
      $region23: #{tpu_custom_call.1} parent=5 // pred_region
        %s87 = ssub.s32 %s9, 1
        // Predicated region
        $region25: #{tpu_custom_call.1} parent=23 // pred_check
          %p88 = pneg %p30
        $region26: #{tpu_custom_call.1} parent=23 // pred_check_branch
          %90 = sbr.rel (%p88) target = $region28
        $region27: #{tpu_custom_call.1} parent=23 // pred_region
          %91 = dma.done [#allocation3], 128
        $region28: #{tpu_custom_call.1} parent=23 // pred_fallthru
          _
        %p92 = pneg %p30
        %p93 = pneg %p27
        %p94 = pneg %p51
        %p95 = pneg %p48
        %v96 = vld [vmem:[#allocation2] sm:$0xff]
        %97 = vst [vmem:[#allocation5] sm:$0xff] %v96
        // Predicated region
        $region29: #{tpu_custom_call.1} parent=23 // pred_check
          %p98 = pneg %p48
        $region30: #{tpu_custom_call.1} parent=23 // pred_check_branch
          %100 = sbr.rel (%p98) target = $region32
        $region31: #{tpu_custom_call.1} parent=23 // pred_region
          %s102 = ssub.s32 128, 128
          %103 = vsyncadd [#allocation4], %s102
          %s105 = sshll.u32 [#allocation5], 4
          %s106 = int_to_ptr.vmem [resolvable:$true] %s105
          %108 = dma.vmem_to_hbm [thread:$0]  %s106, 128, %s1, [#allocation4]
        $region32: #{tpu_custom_call.1} parent=23 // pred_fallthru
          _
        // Predicated region
        $region33: #{tpu_custom_call.1} parent=23 // pred_check
          %p109 = pneg %p48
        $region34: #{tpu_custom_call.1} parent=23 // pred_check_branch
          %111 = sbr.rel (%p109) target = $region36
        $region35: #{tpu_custom_call.1} parent=23 // pred_region
          %112 = dma.done [#allocation4], 128
        $region36: #{tpu_custom_call.1} parent=23 // pred_fallthru
          _
      $region24: #{tpu_custom_call.1} parent=5 // pred_fallthru
        _
      %p113 = scmp.le.s32.totalorder 2, %s9
      // Predicated region
      $region37: #{tpu_custom_call.1} parent=5 // pred_check
        %p114 = pneg %p113
      $region38: #{tpu_custom_call.1} parent=5 // pred_check_branch
        %116 = sbr.rel (%p114) target = $region40
      $region39: #{tpu_custom_call.1} parent=5 // pred_region
        %s117 = ssub.s32 %s9, 2
      $region40: #{tpu_custom_call.1} parent=5 // pred_fallthru
        _
    $region6: #{tpu_custom_call.1} parent=1 // loop_footer
      %s13 = sadd.s32 1, %s9
    $region7: #{tpu_custom_call.1} parent=1 // loop_footer_branch
      %8 = sbr.rel target = $region3
    $region8: #{tpu_custom_call.1} parent=1 // loop_exit
      _
    %118 = vsyncpa [#allocation3], 1
    %s119 = scalar_lea.sflag [#allocation3], 1
    %120 = vsyncpa %s119, 1
    %121 = vsyncpa [#allocation4], 1
    %s122 = scalar_lea.sflag [#allocation4], 1
    %123 = vsyncpa %s122, 1

// kernel: conv_bn_relu.3
$region0: #{conv_bn_relu.3}
  #allocation0 [shape = 'u32[]', space=smem, size = 0x4, offset = 0x4, fixed_abs, tag = 'smem constant byte address 0x4 - core index']
  #allocation1 [shape = 'u32[144,128]{1,0:T(1,128)}', space=vmem, size = 0x12000, scoped, tag = 'internal scratch']
  %s0 = inlined_call_operand.vmem [shape: f32[2,256,8], index: 0, kind: input, shape index: {}]
  %s1 = inlined_call_operand.vmem [shape: f32[2,8], index: 1, kind: input, shape index: {}]
  %s2 = inlined_call_operand.vmem [shape: f32[2,256,8], index: 2, kind: output, shape index: {}]
  %s3 = sld [smem:[#allocation0]]
  $region41: #{conv_bn_relu.3} parent=0
    _
  %s5 = ssub.s32 1, %s3
  %s6 = scalar_select 0, %s5, %s3
  loop: start=0, step=1, limit=4
  $region2: #{conv_bn_relu.3} parent=0 // loop_pre_header
    _
  $region3: #{conv_bn_relu.3} parent=0 // loop_header
    %s8 = sphi 0, %s12
    %p9 = scmp.ge.s32.totalorder %s8, 4
    %s18 = sphi 0, %s20
    %s21 = sphi 0, %s18
    %s22 = sphi 0, %s21
    %s38 = sphi 0, %s22
    %s42 = sphi 0, %s42
    %s44 = sphi 0, %s42
    %s45 = sphi 0, %s44
    %s59 = sphi 0, %s45
    %s65 = sphi 0, %s67
    %s68 = sphi 0, %s65
    %s69 = sphi 0, %s68
    %s85 = sphi 0, %s69
  $region4: #{conv_bn_relu.3} parent=0 // loop_header_branch
    %11 = sbr.rel (%p9) target = $region8
  $region5: #{conv_bn_relu.3} parent=0 // loop_body
    %s13 = ssub.s32 %s8, 1
    %s14 = ssub.s32 %s8, 2
    %s15 = sadd.s32 %s8, 1
    %s16 = ssub.s32 %s8, %s15
    %p17 = scmp.eq.s32.totalorder %s16, 0
    %s19 = sadd.s32 %s18, 1
    %s20 = scalar_select %p17, %s18, %s19
    %p23 = pneg %p17
    %p24 = scmp.eq.s32.totalorder %s8, 1
    %p25 = por %p23, %p24
    %p26 = scmp.ne.s32.totalorder %s18, %s21
    %p27 = scmp.eq.s32.totalorder %s8, 0
    %p28 = por %p26, %p27
    %p29 = scmp.ne.s32.totalorder %s18, %s21
    %p30 = scmp.eq.s32.totalorder %s13, 1
    %p31 = por %p29, %p30
    %p32 = scmp.ne.s32.totalorder %s21, %s22
    %p33 = scmp.eq.s32.totalorder %s13, 0
    %p34 = por %p32, %p33
    %p35 = scmp.ne.s32.totalorder %s21, %s22
    %p36 = scmp.eq.s32.totalorder %s14, 1
    %p37 = por %p35, %p36
    %p39 = scmp.ne.s32.totalorder %s22, %s38
    %p40 = scmp.eq.s32.totalorder %s14, 0
    %p41 = por %p39, %p40
    %s43 = sadd.s32 %s42, 1
    %p46 = scmp.eq.s32.totalorder %s8, 1
    %p47 = scmp.ne.s32.totalorder %s42, %s44
    %p48 = scmp.eq.s32.totalorder %s8, 0
    %p49 = por %p47, %p48
    %p50 = scmp.ne.s32.totalorder %s42, %s44
    %p51 = scmp.eq.s32.totalorder %s13, 1
    %p52 = por %p50, %p51
    %p53 = scmp.ne.s32.totalorder %s44, %s45
    %p54 = scmp.eq.s32.totalorder %s13, 0
    %p55 = por %p53, %p54
    %p56 = scmp.ne.s32.totalorder %s44, %s45
    %p57 = scmp.eq.s32.totalorder %s14, 1
    %p58 = por %p56, %p57
    %p60 = scmp.ne.s32.totalorder %s45, %s59
    %p61 = scmp.eq.s32.totalorder %s14, 0
    %p62 = por %p60, %p61
    %s63 = ssub.s32 %s8, %s15
    %p64 = scmp.eq.s32.totalorder %s63, 0
    %s66 = sadd.s32 %s65, 1
    %s67 = scalar_select %p64, %s65, %s66
    %p70 = pneg %p64
    %p71 = scmp.eq.s32.totalorder %s8, 1
    %p72 = por %p70, %p71
    %p73 = scmp.ne.s32.totalorder %s65, %s68
    %p74 = scmp.eq.s32.totalorder %s8, 0
    %p75 = por %p73, %p74
    %p76 = scmp.ne.s32.totalorder %s65, %s68
    %p77 = scmp.eq.s32.totalorder %s13, 1
    %p78 = por %p76, %p77
    %p79 = scmp.ne.s32.totalorder %s68, %s69
    %p80 = scmp.eq.s32.totalorder %s13, 0
    %p81 = por %p79, %p80
    %p82 = scmp.ne.s32.totalorder %s68, %s69
    %p83 = scmp.eq.s32.totalorder %s14, 1
    %p84 = por %p82, %p83
    %p86 = scmp.ne.s32.totalorder %s69, %s85
    %p87 = scmp.eq.s32.totalorder %s14, 0
    %p88 = por %p86, %p87
    %p89 = scmp.le.s32.totalorder 1, %s8
    %p90 = scmp.lt.s32.totalorder %s8, 3
    %p91 = pnand %p89, %p90
    %p92 = pneg %p91
    // Predicated region
    $region9: #{conv_bn_relu.3} parent=5 // pred_check
      _
    $region10: #{conv_bn_relu.3} parent=5 // pred_check_branch
      %94 = sbr.rel (%p91) target = $region12
    $region11: #{conv_bn_relu.3} parent=5 // pred_region
      %s95 = ssub.s32 %s8, 1
      // Predicated region
      $region13: #{conv_bn_relu.3} parent=11 // pred_check
        %p96 = pneg %p55
      $region14: #{conv_bn_relu.3} parent=11 // pred_check_branch
        %98 = sbr.rel (%p96) target = $region16
      $region15: #{conv_bn_relu.3} parent=11 // pred_region
        _
      $region16: #{conv_bn_relu.3} parent=11 // pred_fallthru
        _
    $region12: #{conv_bn_relu.3} parent=5 // pred_fallthru
      _
    %p99 = scmp.lt.s32.totalorder %s8, 2
    // Predicated region
    $region17: #{conv_bn_relu.3} parent=5 // pred_check
      %p100 = pneg %p99
    $region18: #{conv_bn_relu.3} parent=5 // pred_check_branch
      %102 = sbr.rel (%p100) target = $region20
    $region19: #{conv_bn_relu.3} parent=5 // pred_region
      // Predicated region
      $region21: #{conv_bn_relu.3} parent=19 // pred_check
        %p103 = pneg %p28
      $region22: #{conv_bn_relu.3} parent=19 // pred_check_branch
        %105 = sbr.rel (%p103) target = $region24
      $region23: #{conv_bn_relu.3} parent=19 // pred_region
        %p106 = scmp.lt.s32.totalorder %s8, 1
        %s107 = scalar_select %p106, %s8, 1
        %s108 = smul.addr %s107, 32
        %s109 = smul.addr %s108, 8
        %s110 = scalar_lea.vmem %s0, %s109
      $region24: #{conv_bn_relu.3} parent=19 // pred_fallthru
        _
    $region20: #{conv_bn_relu.3} parent=5 // pred_fallthru
      _
    %p111 = scmp.le.s32.totalorder 1, %s8
    %p112 = scmp.lt.s32.totalorder %s8, 3
    %p113 = pnand %p111, %p112
    %p114 = pneg %p113
    // Predicated region
    $region25: #{conv_bn_relu.3} parent=5 // pred_check
      _
    $region26: #{conv_bn_relu.3} parent=5 // pred_check_branch
      %116 = sbr.rel (%p113) target = $region28
    $region27: #{conv_bn_relu.3} parent=5 // pred_region
      %s117 = ssub.s32 %s8, 1
      %p118 = scmp.lt.s32.totalorder %s13, 1
      %s119 = scalar_select %p118, %s13, 1
      %s120 = smul.addr %s119, 32
      %s121 = smul.addr %s120, 8
      %s122 = scalar_lea.vmem %s0, %s121
      %p123 = pneg %p34
      %p124 = pneg %p31
      %p125 = pneg %p55
      %p126 = pneg %p52
      %p127 = pneg %p81
      %p128 = pneg %p78
      %p129 = scmp.lt.s32.totalorder %s13, 1
      %s130 = scalar_select %p129, %s13, 1
      %s131 = smul.addr %s130, 32
      %s132 = smul.addr %s131, 8
      %s133 = scalar_lea.vmem %s2, %s132
      %p134 = scmp.lt.s32.totalorder %s13, 1
      %s135 = scalar_select %p134, %s13, 1
      %s136 = smul.addr %s135, 32
      %s137 = smul.addr %s136, 8
      %s138 = scalar_lea.vmem %s0, %s137
      %p139 = scmp.lt.s32.totalorder %s13, 1
      %s140 = scalar_select %p139, %s13, 1
      %s141 = smul.addr %s140, 32
      %s142 = smul.addr %s141, 8
      %s143 = scalar_lea.vmem %s2, %s142
      %v144 = vld [vmem:[%s138] sm:$0xff]
      %v145 = vld [vmem:[%s138 + $0x8] sm:$0xff]
      %v146 = vld [vmem:[%s138 + $0x10] sm:$0xff]
      %v147 = vld [vmem:[%s138 + $0x18] sm:$0xff]
      %v148 = vld [vmem:[%s138 + $0x20] sm:$0xff]
      %v149 = vld [vmem:[%s138 + $0x28] sm:$0xff]
      %v150 = vld [vmem:[%s138 + $0x30] sm:$0xff]
      %v151 = vld [vmem:[%s138 + $0x38] sm:$0xff]
      %v152 = vld [vmem:[%s138 + $0x40] sm:$0xff]
      %v153 = vld [vmem:[%s138 + $0x48] sm:$0xff]
      %v154 = vld [vmem:[%s138 + $0x50] sm:$0xff]
      %v155 = vld [vmem:[%s138 + $0x58] sm:$0xff]
      %v156 = vld [vmem:[%s138 + $0x60] sm:$0xff]
      %v157 = vld [vmem:[%s138 + $0x68] sm:$0xff]
      %v158 = vld [vmem:[%s138 + $0x70] sm:$0xff]
      %v159 = vld [vmem:[%s138 + $0x78] sm:$0xff]
      %v160 = vld [vmem:[%s138 + $0x80] sm:$0xff]
      %v161 = vld [vmem:[%s138 + $0x88] sm:$0xff]
      %v162 = vld [vmem:[%s138 + $0x90] sm:$0xff]
      %v163 = vld [vmem:[%s138 + $0x98] sm:$0xff]
      %v164 = vld [vmem:[%s138 + $0xa0] sm:$0xff]
      %v165 = vld [vmem:[%s138 + $0xa8] sm:$0xff]
      %v166 = vld [vmem:[%s138 + $0xb0] sm:$0xff]
      %v167 = vld [vmem:[%s138 + $0xb8] sm:$0xff]
      %v168 = vld [vmem:[%s138 + $0xc0] sm:$0xff]
      %v169 = vld [vmem:[%s138 + $0xc8] sm:$0xff]
      %v170 = vld [vmem:[%s138 + $0xd0] sm:$0xff]
      %v171 = vld [vmem:[%s138 + $0xd8] sm:$0xff]
      %v172 = vld [vmem:[%s138 + $0xe0] sm:$0xff]
      %v173 = vld [vmem:[%s138 + $0xe8] sm:$0xff]
      %v174 = vld [vmem:[%s138 + $0xf0] sm:$0xff]
      %v175 = vld [vmem:[%s138 + $0xf8] sm:$0xff]
      %v176 = vld [vmem:[%s1] sm:$0x1]
      %v177 = vlaneseq
      %v178 = vshrl.u32 %v177, 7
      %v179 = vsub.s32 0, %v178
      %v180 = vrot.slane %v176, %v179
      %v181 = vmul.f32 %v144, %v180
      %v182 = vmul.f32 %v145, %v180
      %v183 = vmul.f32 %v146, %v180
      %v184 = vmul.f32 %v147, %v180
      %v185 = vmul.f32 %v148, %v180
      %v186 = vmul.f32 %v149, %v180
      %v187 = vmul.f32 %v150, %v180
      %v188 = vmul.f32 %v151, %v180
      %v189 = vmul.f32 %v152, %v180
      %v190 = vmul.f32 %v153, %v180
      %v191 = vmul.f32 %v154, %v180
      %v192 = vmul.f32 %v155, %v180
      %v193 = vmul.f32 %v156, %v180
      %v194 = vmul.f32 %v157, %v180
      %v195 = vmul.f32 %v158, %v180
      %v196 = vmul.f32 %v159, %v180
      %v197 = vmul.f32 %v160, %v180
      %v198 = vmul.f32 %v161, %v180
      %v199 = vmul.f32 %v162, %v180
      %v200 = vmul.f32 %v163, %v180
      %v201 = vmul.f32 %v164, %v180
      %v202 = vmul.f32 %v165, %v180
      %v203 = vmul.f32 %v166, %v180
      %v204 = vmul.f32 %v167, %v180
      %v205 = vmul.f32 %v168, %v180
      %v206 = vmul.f32 %v169, %v180
      %v207 = vmul.f32 %v170, %v180
      %v208 = vmul.f32 %v171, %v180
      %v209 = vmul.f32 %v172, %v180
      %v210 = vmul.f32 %v173, %v180
      %v211 = vmul.f32 %v174, %v180
      %v212 = vmul.f32 %v175, %v180
      %v213 = vld [vmem:[%s1 + $0x1] sm:$0x1]
      %v214 = vlaneseq
      %v215 = vshrl.u32 %v214, 7
      %v216 = vsub.s32 0, %v215
      %v217 = vrot.slane %v213, %v216
      %v218 = vadd.f32 %v181, %v217
      %v219 = vadd.f32 %v182, %v217
      %v220 = vadd.f32 %v183, %v217
      %v221 = vadd.f32 %v184, %v217
      %v222 = vadd.f32 %v185, %v217
      %v223 = vadd.f32 %v186, %v217
      %v224 = vadd.f32 %v187, %v217
      %v225 = vadd.f32 %v188, %v217
      %v226 = vadd.f32 %v189, %v217
      %v227 = vadd.f32 %v190, %v217
      %v228 = vadd.f32 %v191, %v217
      %v229 = vadd.f32 %v192, %v217
      %v230 = vadd.f32 %v193, %v217
      %v231 = vadd.f32 %v194, %v217
      %v232 = vadd.f32 %v195, %v217
      %v233 = vadd.f32 %v196, %v217
      %v234 = vadd.f32 %v197, %v217
      %v235 = vadd.f32 %v198, %v217
      %v236 = vadd.f32 %v199, %v217
      %v237 = vadd.f32 %v200, %v217
      %v238 = vadd.f32 %v201, %v217
      %v239 = vadd.f32 %v202, %v217
      %v240 = vadd.f32 %v203, %v217
      %v241 = vadd.f32 %v204, %v217
      %v242 = vadd.f32 %v205, %v217
      %v243 = vadd.f32 %v206, %v217
      %v244 = vadd.f32 %v207, %v217
      %v245 = vadd.f32 %v208, %v217
      %v246 = vadd.f32 %v209, %v217
      %v247 = vadd.f32 %v210, %v217
      %v248 = vadd.f32 %v211, %v217
      %v249 = vadd.f32 %v212, %v217
      %v250 = vmax.f32 %v218, 0.0
      %v251 = vmax.f32 %v219, 0.0
      %v252 = vmax.f32 %v220, 0.0
      %v253 = vmax.f32 %v221, 0.0
      %v254 = vmax.f32 %v222, 0.0
      %v255 = vmax.f32 %v223, 0.0
      %v256 = vmax.f32 %v224, 0.0
      %v257 = vmax.f32 %v225, 0.0
      %v258 = vmax.f32 %v226, 0.0
      %v259 = vmax.f32 %v227, 0.0
      %v260 = vmax.f32 %v228, 0.0
      %v261 = vmax.f32 %v229, 0.0
      %v262 = vmax.f32 %v230, 0.0
      %v263 = vmax.f32 %v231, 0.0
      %v264 = vmax.f32 %v232, 0.0
      %v265 = vmax.f32 %v233, 0.0
      %v266 = vmax.f32 %v234, 0.0
      %v267 = vmax.f32 %v235, 0.0
      %v268 = vmax.f32 %v236, 0.0
      %v269 = vmax.f32 %v237, 0.0
      %v270 = vmax.f32 %v238, 0.0
      %v271 = vmax.f32 %v239, 0.0
      %v272 = vmax.f32 %v240, 0.0
      %v273 = vmax.f32 %v241, 0.0
      %v274 = vmax.f32 %v242, 0.0
      %v275 = vmax.f32 %v243, 0.0
      %v276 = vmax.f32 %v244, 0.0
      %v277 = vmax.f32 %v245, 0.0
      %v278 = vmax.f32 %v246, 0.0
      %v279 = vmax.f32 %v247, 0.0
      %v280 = vmax.f32 %v248, 0.0
      %v281 = vmax.f32 %v249, 0.0
      %vm282 = vcmask 64512
      %283 = vst.msk [vmem:[%s143] sm:$0xff] %vm282, %v250
      %284 = vst.msk [vmem:[%s143 + $0x8] sm:$0xff] %vm282, %v251
      %285 = vst.msk [vmem:[%s143 + $0x10] sm:$0xff] %vm282, %v252
      %286 = vst.msk [vmem:[%s143 + $0x18] sm:$0xff] %vm282, %v253
      %287 = vst.msk [vmem:[%s143 + $0x20] sm:$0xff] %vm282, %v254
      %288 = vst.msk [vmem:[%s143 + $0x28] sm:$0xff] %vm282, %v255
      %289 = vst.msk [vmem:[%s143 + $0x30] sm:$0xff] %vm282, %v256
      %290 = vst.msk [vmem:[%s143 + $0x38] sm:$0xff] %vm282, %v257
      %291 = vst.msk [vmem:[%s143 + $0x40] sm:$0xff] %vm282, %v258
      %292 = vst.msk [vmem:[%s143 + $0x48] sm:$0xff] %vm282, %v259
      %293 = vst.msk [vmem:[%s143 + $0x50] sm:$0xff] %vm282, %v260
      %294 = vst.msk [vmem:[%s143 + $0x58] sm:$0xff] %vm282, %v261
      %295 = vst.msk [vmem:[%s143 + $0x60] sm:$0xff] %vm282, %v262
      %296 = vst.msk [vmem:[%s143 + $0x68] sm:$0xff] %vm282, %v263
      %297 = vst.msk [vmem:[%s143 + $0x70] sm:$0xff] %vm282, %v264
      %298 = vst.msk [vmem:[%s143 + $0x78] sm:$0xff] %vm282, %v265
      %299 = vst.msk [vmem:[%s143 + $0x80] sm:$0xff] %vm282, %v266
      %300 = vst.msk [vmem:[%s143 + $0x88] sm:$0xff] %vm282, %v267
      %301 = vst.msk [vmem:[%s143 + $0x90] sm:$0xff] %vm282, %v268
      %302 = vst.msk [vmem:[%s143 + $0x98] sm:$0xff] %vm282, %v269
      %303 = vst.msk [vmem:[%s143 + $0xa0] sm:$0xff] %vm282, %v270
      %304 = vst.msk [vmem:[%s143 + $0xa8] sm:$0xff] %vm282, %v271
      %305 = vst.msk [vmem:[%s143 + $0xb0] sm:$0xff] %vm282, %v272
      %306 = vst.msk [vmem:[%s143 + $0xb8] sm:$0xff] %vm282, %v273
      %307 = vst.msk [vmem:[%s143 + $0xc0] sm:$0xff] %vm282, %v274
      %308 = vst.msk [vmem:[%s143 + $0xc8] sm:$0xff] %vm282, %v275
      %309 = vst.msk [vmem:[%s143 + $0xd0] sm:$0xff] %vm282, %v276
      %310 = vst.msk [vmem:[%s143 + $0xd8] sm:$0xff] %vm282, %v277
      %311 = vst.msk [vmem:[%s143 + $0xe0] sm:$0xff] %vm282, %v278
      %312 = vst.msk [vmem:[%s143 + $0xe8] sm:$0xff] %vm282, %v279
      %313 = vst.msk [vmem:[%s143 + $0xf0] sm:$0xff] %vm282, %v280
      %314 = vst.msk [vmem:[%s143 + $0xf8] sm:$0xff] %vm282, %v281
      %p315 = scmp.lt.s32.totalorder %s13, 1
      %s316 = scalar_select %p315, %s13, 1
      %s317 = smul.addr %s316, 32
      %s318 = smul.addr %s317, 8
      %s319 = scalar_lea.vmem %s2, %s318
      // Predicated region
      $region29: #{conv_bn_relu.3} parent=27 // pred_check
        %p320 = pneg %p78
      $region30: #{conv_bn_relu.3} parent=27 // pred_check_branch
        %322 = sbr.rel (%p320) target = $region32
      $region31: #{conv_bn_relu.3} parent=27 // pred_region
        _
      $region32: #{conv_bn_relu.3} parent=27 // pred_fallthru
        _
    $region28: #{conv_bn_relu.3} parent=5 // pred_fallthru
      _
    %p323 = scmp.le.s32.totalorder 2, %s8
    // Predicated region
    $region33: #{conv_bn_relu.3} parent=5 // pred_check
      %p324 = pneg %p323
    $region34: #{conv_bn_relu.3} parent=5 // pred_check_branch
      %326 = sbr.rel (%p324) target = $region36
    $region35: #{conv_bn_relu.3} parent=5 // pred_region
      %s327 = ssub.s32 %s8, 2
      // Predicated region
      $region37: #{conv_bn_relu.3} parent=35 // pred_check
        %p328 = pneg %p84
      $region38: #{conv_bn_relu.3} parent=35 // pred_check_branch
        %330 = sbr.rel (%p328) target = $region40
      $region39: #{conv_bn_relu.3} parent=35 // pred_region
        %p331 = scmp.lt.s32.totalorder %s14, 1
        %s332 = scalar_select %p331, %s14, 1
        %s333 = smul.addr %s332, 32
        %s334 = smul.addr %s333, 8
        %s335 = scalar_lea.vmem %s2, %s334
      $region40: #{conv_bn_relu.3} parent=35 // pred_fallthru
        _
    $region36: #{conv_bn_relu.3} parent=5 // pred_fallthru
      _
  $region6: #{conv_bn_relu.3} parent=0 // loop_footer
    %s12 = sadd.s32 1, %s8
  $region7: #{conv_bn_relu.3} parent=0 // loop_footer_branch
    %7 = sbr.rel target = $region3
  $region8: #{conv_bn_relu.3} parent=0 // loop_exit
    _

// kernel: conv_bn_relu.2
$region0: #{conv_bn_relu.2}
  #allocation0 [shape = 'u32[]', space=smem, size = 0x4, offset = 0x4, fixed_abs, tag = 'smem constant byte address 0x4 - core index']
  #allocation1 [shape = 'u32[144,128]{1,0:T(1,128)}', space=vmem, size = 0x12000, scoped, tag = 'internal scratch']
  %s0 = inlined_call_operand.vmem [shape: f32[2,18,18,4], index: 0, kind: input, shape index: {}]
  %s1 = inlined_call_operand.vmem [shape: f32[40,128], index: 1, kind: input, shape index: {}]
  %s2 = inlined_call_operand.vmem [shape: f32[2,256,8], index: 2, kind: output, shape index: {0}]
  %s3 = inlined_call_operand.vmem [shape: f32[2,2,8], index: 3, kind: output, shape index: {1}]
  %4 = xla_tuple %s2, %s3
  %s5 = sld [smem:[#allocation0]]
  $region49: #{conv_bn_relu.2} parent=0
    _
  %s7 = ssub.s32 1, %s5
  %s8 = scalar_select 0, %s7, %s5
  loop: start=0, step=1, limit=4
  $region2: #{conv_bn_relu.2} parent=0 // loop_pre_header
    _
  $region3: #{conv_bn_relu.2} parent=0 // loop_header
    %s10 = sphi 0, %s14
    %p11 = scmp.ge.s32.totalorder %s10, 4
    %s17 = sphi 0, %s29
    %s18 = sphi 0, %s25
    %s19 = sphi 0, %s17
    %s20 = sphi 0, %s18
    %s21 = sphi 0, %s19
    %s22 = sphi 0, %s20
    %s32 = sphi 0, %s34
    %s35 = sphi 0, %s32
    %s36 = sphi 0, %s35
    %s52 = sphi 0, %s36
    %s56 = sphi 0, %s56
    %s58 = sphi 0, %s56
    %s59 = sphi 0, %s58
    %s73 = sphi 0, %s59
    %s81 = sphi 0, %s83
    %s84 = sphi 0, %s81
    %s85 = sphi 0, %s84
    %s101 = sphi 0, %s85
    %s109 = sphi 0, %s111
    %s112 = sphi 0, %s109
    %s113 = sphi 0, %s112
    %s129 = sphi 0, %s113
  $region4: #{conv_bn_relu.2} parent=0 // loop_header_branch
    %13 = sbr.rel (%p11) target = $region8
  $region5: #{conv_bn_relu.2} parent=0 // loop_body
    %s15 = ssub.s32 %s10, 1
    %s16 = ssub.s32 %s10, 2
    %s23 = sadd.s32 1, %s18
    %p24 = scmp.ge.s32.totalorder %s23, 1
    %s25 = scalar_select %p24, 0, %s23
    %s26 = sadd.s32 1, %s17
    %s27 = scalar_select %p24, %s26, %s17
    %p28 = scmp.ge.s32.totalorder %s27, 2
    %s29 = scalar_select %p28, 0, %s27
    %s30 = ssub.s32 %s17, %s29
    %p31 = scmp.eq.s32.totalorder %s30, 0
    %s33 = sadd.s32 %s32, 1
    %s34 = scalar_select %p31, %s32, %s33
    %p37 = pneg %p31
    %p38 = scmp.eq.s32.totalorder %s10, 1
    %p39 = por %p37, %p38
    %p40 = scmp.ne.s32.totalorder %s32, %s35
    %p41 = scmp.eq.s32.totalorder %s10, 0
    %p42 = por %p40, %p41
    %p43 = scmp.ne.s32.totalorder %s32, %s35
    %p44 = scmp.eq.s32.totalorder %s15, 1
    %p45 = por %p43, %p44
    %p46 = scmp.ne.s32.totalorder %s35, %s36
    %p47 = scmp.eq.s32.totalorder %s15, 0
    %p48 = por %p46, %p47
    %p49 = scmp.ne.s32.totalorder %s35, %s36
    %p50 = scmp.eq.s32.totalorder %s16, 1
    %p51 = por %p49, %p50
    %p53 = scmp.ne.s32.totalorder %s36, %s52
    %p54 = scmp.eq.s32.totalorder %s16, 0
    %p55 = por %p53, %p54
    %s57 = sadd.s32 %s56, 1
    %p60 = scmp.eq.s32.totalorder %s10, 1
    %p61 = scmp.ne.s32.totalorder %s56, %s58
    %p62 = scmp.eq.s32.totalorder %s10, 0
    %p63 = por %p61, %p62
    %p64 = scmp.ne.s32.totalorder %s56, %s58
    %p65 = scmp.eq.s32.totalorder %s15, 1
    %p66 = por %p64, %p65
    %p67 = scmp.ne.s32.totalorder %s58, %s59
    %p68 = scmp.eq.s32.totalorder %s15, 0
    %p69 = por %p67, %p68
    %p70 = scmp.ne.s32.totalorder %s58, %s59
    %p71 = scmp.eq.s32.totalorder %s16, 1
    %p72 = por %p70, %p71
    %p74 = scmp.ne.s32.totalorder %s59, %s73
    %p75 = scmp.eq.s32.totalorder %s16, 0
    %p76 = por %p74, %p75
    %s77 = sadd.s32 %s17, %s18
    %s78 = sadd.s32 %s29, %s25
    %s79 = ssub.s32 %s77, %s78
    %p80 = scmp.eq.s32.totalorder %s79, 0
    %s82 = sadd.s32 %s81, 1
    %s83 = scalar_select %p80, %s81, %s82
    %p86 = pneg %p80
    %p87 = scmp.eq.s32.totalorder %s10, 1
    %p88 = por %p86, %p87
    %p89 = scmp.ne.s32.totalorder %s81, %s84
    %p90 = scmp.eq.s32.totalorder %s10, 0
    %p91 = por %p89, %p90
    %p92 = scmp.ne.s32.totalorder %s81, %s84
    %p93 = scmp.eq.s32.totalorder %s15, 1
    %p94 = por %p92, %p93
    %p95 = scmp.ne.s32.totalorder %s84, %s85
    %p96 = scmp.eq.s32.totalorder %s15, 0
    %p97 = por %p95, %p96
    %p98 = scmp.ne.s32.totalorder %s84, %s85
    %p99 = scmp.eq.s32.totalorder %s16, 1
    %p100 = por %p98, %p99
    %p102 = scmp.ne.s32.totalorder %s85, %s101
    %p103 = scmp.eq.s32.totalorder %s16, 0
    %p104 = por %p102, %p103
    %s105 = sadd.s32 %s17, %s18
    %s106 = sadd.s32 %s29, %s25
    %s107 = ssub.s32 %s105, %s106
    %p108 = scmp.eq.s32.totalorder %s107, 0
    %s110 = sadd.s32 %s109, 1
    %s111 = scalar_select %p108, %s109, %s110
    %p114 = pneg %p108
    %p115 = scmp.eq.s32.totalorder %s10, 1
    %p116 = por %p114, %p115
    %p117 = scmp.ne.s32.totalorder %s109, %s112
    %p118 = scmp.eq.s32.totalorder %s10, 0
    %p119 = por %p117, %p118
    %p120 = scmp.ne.s32.totalorder %s109, %s112
    %p121 = scmp.eq.s32.totalorder %s15, 1
    %p122 = por %p120, %p121
    %p123 = scmp.ne.s32.totalorder %s112, %s113
    %p124 = scmp.eq.s32.totalorder %s15, 0
    %p125 = por %p123, %p124
    %p126 = scmp.ne.s32.totalorder %s112, %s113
    %p127 = scmp.eq.s32.totalorder %s16, 1
    %p128 = por %p126, %p127
    %p130 = scmp.ne.s32.totalorder %s113, %s129
    %p131 = scmp.eq.s32.totalorder %s16, 0
    %p132 = por %p130, %p131
    %p133 = scmp.le.s32.totalorder 1, %s10
    %p134 = scmp.lt.s32.totalorder %s10, 3
    %p135 = pnand %p133, %p134
    %p136 = pneg %p135
    // Predicated region
    $region9: #{conv_bn_relu.2} parent=5 // pred_check
      _
    $region10: #{conv_bn_relu.2} parent=5 // pred_check_branch
      %138 = sbr.rel (%p135) target = $region12
    $region11: #{conv_bn_relu.2} parent=5 // pred_region
      %s139 = ssub.s32 %s10, 1
      // Predicated region
      $region13: #{conv_bn_relu.2} parent=11 // pred_check
        %p140 = pneg %p69
      $region14: #{conv_bn_relu.2} parent=11 // pred_check_branch
        %142 = sbr.rel (%p140) target = $region16
      $region15: #{conv_bn_relu.2} parent=11 // pred_region
        _
      $region16: #{conv_bn_relu.2} parent=11 // pred_fallthru
        _
    $region12: #{conv_bn_relu.2} parent=5 // pred_fallthru
      _
    %p143 = scmp.lt.s32.totalorder %s10, 2
    // Predicated region
    $region17: #{conv_bn_relu.2} parent=5 // pred_check
      %p144 = pneg %p143
    $region18: #{conv_bn_relu.2} parent=5 // pred_check_branch
      %146 = sbr.rel (%p144) target = $region20
    $region19: #{conv_bn_relu.2} parent=5 // pred_region
      // Predicated region
      $region21: #{conv_bn_relu.2} parent=19 // pred_check
        %p147 = pneg %p42
      $region22: #{conv_bn_relu.2} parent=19 // pred_check_branch
        %149 = sbr.rel (%p147) target = $region24
      $region23: #{conv_bn_relu.2} parent=19 // pred_region
        %p150 = scmp.lt.s32.totalorder %s17, 1
        %s151 = scalar_select %p150, %s17, 1
        %s152 = smul.addr %s151, 54
        %s153 = smul.addr %s152, 8
        %s154 = scalar_lea.vmem %s0, %s153
      $region24: #{conv_bn_relu.2} parent=19 // pred_fallthru
        _
    $region20: #{conv_bn_relu.2} parent=5 // pred_fallthru
      _
    %p155 = scmp.le.s32.totalorder 1, %s10
    %p156 = scmp.lt.s32.totalorder %s10, 3
    %p157 = pnand %p155, %p156
    %p158 = pneg %p157
    // Predicated region
    $region25: #{conv_bn_relu.2} parent=5 // pred_check
      _
    $region26: #{conv_bn_relu.2} parent=5 // pred_check_branch
      %160 = sbr.rel (%p157) target = $region28
    $region27: #{conv_bn_relu.2} parent=5 // pred_region
      %s161 = ssub.s32 %s10, 1
      %p162 = scmp.lt.s32.totalorder %s19, 1
      %s163 = scalar_select %p162, %s19, 1
      %s164 = smul.addr %s163, 54
      %s165 = smul.addr %s164, 8
      %s166 = scalar_lea.vmem %s0, %s165
      %p167 = pneg %p48
      %p168 = pneg %p45
      %p169 = pneg %p69
      %p170 = pneg %p66
      %p171 = pneg %p97
      %p172 = pneg %p94
      %s173 = sadd.s32 %s19, %s20
      %p174 = scmp.lt.s32.totalorder %s173, 1
      %s175 = scalar_select %p174, %s173, 1
      %s176 = smul.addr %s175, 32
      %s177 = smul.addr %s176, 8
      %s178 = scalar_lea.vmem %s2, %s177
      %p179 = pneg %p125
      %p180 = pneg %p122
      %s181 = sadd.s32 %s19, %s20
      %p182 = scmp.lt.s32.totalorder %s181, 1
      %s183 = scalar_select %p182, %s181, 1
      %s184 = smul.addr %s183, 2
      %s185 = scalar_lea.vmem %s3, %s184
      %p186 = scmp.lt.s32.totalorder %s19, 1
      %s187 = scalar_select %p186, %s19, 1
      %s188 = smul.addr %s187, 54
      %s189 = smul.addr %s188, 8
      %s190 = scalar_lea.vmem %s0, %s189
      %s191 = sadd.s32 %s19, %s20
      %p192 = scmp.lt.s32.totalorder %s191, 1
      %s193 = scalar_select %p192, %s191, 1
      %s194 = smul.addr %s193, 32
      %s195 = smul.addr %s194, 8
      %s196 = scalar_lea.vmem %s2, %s195
      %s197 = sadd.s32 %s19, %s20
      %s198 = sadd.s32 %s19, %s20
      %p199 = scmp.lt.s32.totalorder %s198, 1
      %s200 = scalar_select %p199, %s198, 1
      %s201 = smul.addr %s200, 2
      %s202 = scalar_lea.vmem %s3, %s201
      %s203 = sadd.s32 %s19, %s20
      %s204 = smul.u32 %s20, 16
      %s205 = smul.u32 %s204, 24
      %s206 = scalar_lea.vmem %s190, %s205
      %v207 = vld [vmem:[%s206] sm:$0xff]
      %v208 = vld [vmem:[%s206 + $0x8] sm:$0xff]
      %v209 = vld [vmem:[%s206 + $0x18] sm:$0xff]
      %v210 = vld [vmem:[%s206 + $0x20] sm:$0xff]
      %v211 = vld [vmem:[%s206 + $0x30] sm:$0xff]
      %v212 = vld [vmem:[%s206 + $0x38] sm:$0xff]
      %v213 = vld [vmem:[%s206 + $0x48] sm:$0xff]
      %v214 = vld [vmem:[%s206 + $0x50] sm:$0xff]
      %v215 = vld [vmem:[%s206 + $0x60] sm:$0xff]
      %v216 = vld [vmem:[%s206 + $0x68] sm:$0xff]
      %v217 = vld [vmem:[%s206 + $0x78] sm:$0xff]
      %v218 = vld [vmem:[%s206 + $0x80] sm:$0xff]
      %v219 = vld [vmem:[%s206 + $0x90] sm:$0xff]
      %v220 = vld [vmem:[%s206 + $0x98] sm:$0xff]
      %v221 = vld [vmem:[%s206 + $0xa8] sm:$0xff]
      %v222 = vld [vmem:[%s206 + $0xb0] sm:$0xff]
      %v223 = vld [vmem:[%s206 + $0xc0] sm:$0xff]
      %v224 = vld [vmem:[%s206 + $0xc8] sm:$0xff]
      %v225 = vld [vmem:[%s206 + $0xd8] sm:$0xff]
      %v226 = vld [vmem:[%s206 + $0xe0] sm:$0xff]
      %v227 = vld [vmem:[%s206 + $0xf0] sm:$0xff]
      %v228 = vld [vmem:[%s206 + $0xf8] sm:$0xff]
      %v229 = vld [vmem:[%s206 + $0x108] sm:$0xff]
      %v230 = vld [vmem:[%s206 + $0x110] sm:$0xff]
      %v231 = vld [vmem:[%s206 + $0x120] sm:$0xff]
      %v232 = vld [vmem:[%s206 + $0x128] sm:$0xff]
      %v233 = vld [vmem:[%s206 + $0x138] sm:$0xff]
      %v234 = vld [vmem:[%s206 + $0x140] sm:$0xff]
      %v235 = vld [vmem:[%s206 + $0x150] sm:$0xff]
      %v236 = vld [vmem:[%s206 + $0x158] sm:$0xff]
      %v237 = vld [vmem:[%s206 + $0x168] sm:$0xff]
      %v238 = vld [vmem:[%s206 + $0x170] sm:$0xff]
      %v239 = vld [vmem:[%s206 + $0x1] sm:$0xff]
      %v240 = vld [vmem:[%s206 + $0x9] sm:$0xff]
      %v241 = vld [vmem:[%s206 + $0x19] sm:$0xff]
      %v242 = vld [vmem:[%s206 + $0x21] sm:$0xff]
      %v243 = vld [vmem:[%s206 + $0x31] sm:$0xff]
      %v244 = vld [vmem:[%s206 + $0x39] sm:$0xff]
      %v245 = vld [vmem:[%s206 + $0x49] sm:$0xff]
      %v246 = vld [vmem:[%s206 + $0x51] sm:$0xff]
      %v247 = vld [vmem:[%s206 + $0x61] sm:$0xff]
      %v248 = vld [vmem:[%s206 + $0x69] sm:$0xff]
      %v249 = vld [vmem:[%s206 + $0x79] sm:$0xff]
      %v250 = vld [vmem:[%s206 + $0x81] sm:$0xff]
      %v251 = vld [vmem:[%s206 + $0x91] sm:$0xff]
      %v252 = vld [vmem:[%s206 + $0x99] sm:$0xff]
      %v253 = vld [vmem:[%s206 + $0xa9] sm:$0xff]
      %v254 = vld [vmem:[%s206 + $0xb1] sm:$0xff]
      %v255 = vld [vmem:[%s206 + $0xc1] sm:$0xff]
      %v256 = vld [vmem:[%s206 + $0xc9] sm:$0xff]
      %v257 = vld [vmem:[%s206 + $0xd9] sm:$0xff]
      %v258 = vld [vmem:[%s206 + $0xe1] sm:$0xff]
      %v259 = vld [vmem:[%s206 + $0xf1] sm:$0xff]
      %v260 = vld [vmem:[%s206 + $0xf9] sm:$0xff]
      %v261 = vld [vmem:[%s206 + $0x109] sm:$0xff]
      %v262 = vld [vmem:[%s206 + $0x111] sm:$0xff]
      %v263 = vld [vmem:[%s206 + $0x121] sm:$0xff]
      %v264 = vld [vmem:[%s206 + $0x129] sm:$0xff]
      %v265 = vld [vmem:[%s206 + $0x139] sm:$0xff]
      %v266 = vld [vmem:[%s206 + $0x141] sm:$0xff]
      %v267 = vld [vmem:[%s206 + $0x151] sm:$0xff]
      %v268 = vld [vmem:[%s206 + $0x159] sm:$0xff]
      %v269 = vld [vmem:[%s206 + $0x169] sm:$0xff]
      %v270 = vld [vmem:[%s206 + $0x171] sm:$0xff]
      %v271 = vld [vmem:[%s206 + $0x2] sm:$0xff]
      %v272 = vld [vmem:[%s206 + $0xa] sm:$0xff]
      %v273 = vld [vmem:[%s206 + $0x1a] sm:$0xff]
      %v274 = vld [vmem:[%s206 + $0x22] sm:$0xff]
      %v275 = vld [vmem:[%s206 + $0x32] sm:$0xff]
      %v276 = vld [vmem:[%s206 + $0x3a] sm:$0xff]
      %v277 = vld [vmem:[%s206 + $0x4a] sm:$0xff]
      %v278 = vld [vmem:[%s206 + $0x52] sm:$0xff]
      %v279 = vld [vmem:[%s206 + $0x62] sm:$0xff]
      %v280 = vld [vmem:[%s206 + $0x6a] sm:$0xff]
      %v281 = vld [vmem:[%s206 + $0x7a] sm:$0xff]
      %v282 = vld [vmem:[%s206 + $0x82] sm:$0xff]
      %v283 = vld [vmem:[%s206 + $0x92] sm:$0xff]
      %v284 = vld [vmem:[%s206 + $0x9a] sm:$0xff]
      %v285 = vld [vmem:[%s206 + $0xaa] sm:$0xff]
      %v286 = vld [vmem:[%s206 + $0xb2] sm:$0xff]
      %v287 = vld [vmem:[%s206 + $0xc2] sm:$0xff]
      %v288 = vld [vmem:[%s206 + $0xca] sm:$0xff]
      %v289 = vld [vmem:[%s206 + $0xda] sm:$0xff]
      %v290 = vld [vmem:[%s206 + $0xe2] sm:$0xff]
      %v291 = vld [vmem:[%s206 + $0xf2] sm:$0xff]
      %v292 = vld [vmem:[%s206 + $0xfa] sm:$0xff]
      %v293 = vld [vmem:[%s206 + $0x10a] sm:$0xff]
      %v294 = vld [vmem:[%s206 + $0x112] sm:$0xff]
      %v295 = vld [vmem:[%s206 + $0x122] sm:$0xff]
      %v296 = vld [vmem:[%s206 + $0x12a] sm:$0xff]
      %v297 = vld [vmem:[%s206 + $0x13a] sm:$0xff]
      %v298 = vld [vmem:[%s206 + $0x142] sm:$0xff]
      %v299 = vld [vmem:[%s206 + $0x152] sm:$0xff]
      %v300 = vld [vmem:[%s206 + $0x15a] sm:$0xff]
      %v301 = vld [vmem:[%s206 + $0x16a] sm:$0xff]
      %v302 = vld [vmem:[%s206 + $0x172] sm:$0xff]
      %s303 = sadd.s32 %s204, 1
      %s304 = smul.u32 %s303, 24
      %s305 = scalar_lea.vmem %s190, %s304
      %v306 = vld [vmem:[%s305] sm:$0xff]
      %v307 = vld [vmem:[%s305 + $0x8] sm:$0xff]
      %v308 = vld [vmem:[%s305 + $0x18] sm:$0xff]
      %v309 = vld [vmem:[%s305 + $0x20] sm:$0xff]
      %v310 = vld [vmem:[%s305 + $0x30] sm:$0xff]
      %v311 = vld [vmem:[%s305 + $0x38] sm:$0xff]
      %v312 = vld [vmem:[%s305 + $0x48] sm:$0xff]
      %v313 = vld [vmem:[%s305 + $0x50] sm:$0xff]
      %v314 = vld [vmem:[%s305 + $0x60] sm:$0xff]
      %v315 = vld [vmem:[%s305 + $0x68] sm:$0xff]
      %v316 = vld [vmem:[%s305 + $0x78] sm:$0xff]
      %v317 = vld [vmem:[%s305 + $0x80] sm:$0xff]
      %v318 = vld [vmem:[%s305 + $0x90] sm:$0xff]
      %v319 = vld [vmem:[%s305 + $0x98] sm:$0xff]
      %v320 = vld [vmem:[%s305 + $0xa8] sm:$0xff]
      %v321 = vld [vmem:[%s305 + $0xb0] sm:$0xff]
      %v322 = vld [vmem:[%s305 + $0xc0] sm:$0xff]
      %v323 = vld [vmem:[%s305 + $0xc8] sm:$0xff]
      %v324 = vld [vmem:[%s305 + $0xd8] sm:$0xff]
      %v325 = vld [vmem:[%s305 + $0xe0] sm:$0xff]
      %v326 = vld [vmem:[%s305 + $0xf0] sm:$0xff]
      %v327 = vld [vmem:[%s305 + $0xf8] sm:$0xff]
      %v328 = vld [vmem:[%s305 + $0x108] sm:$0xff]
      %v329 = vld [vmem:[%s305 + $0x110] sm:$0xff]
      %v330 = vld [vmem:[%s305 + $0x120] sm:$0xff]
      %v331 = vld [vmem:[%s305 + $0x128] sm:$0xff]
      %v332 = vld [vmem:[%s305 + $0x138] sm:$0xff]
      %v333 = vld [vmem:[%s305 + $0x140] sm:$0xff]
      %v334 = vld [vmem:[%s305 + $0x150] sm:$0xff]
      %v335 = vld [vmem:[%s305 + $0x158] sm:$0xff]
      %v336 = vld [vmem:[%s305 + $0x168] sm:$0xff]
      %v337 = vld [vmem:[%s305 + $0x170] sm:$0xff]
      %v338 = vld [vmem:[%s305 + $0x1] sm:$0xff]
      %v339 = vld [vmem:[%s305 + $0x9] sm:$0xff]
      %v340 = vld [vmem:[%s305 + $0x19] sm:$0xff]
      %v341 = vld [vmem:[%s305 + $0x21] sm:$0xff]
      %v342 = vld [vmem:[%s305 + $0x31] sm:$0xff]
      %v343 = vld [vmem:[%s305 + $0x39] sm:$0xff]
      %v344 = vld [vmem:[%s305 + $0x49] sm:$0xff]
      %v345 = vld [vmem:[%s305 + $0x51] sm:$0xff]
      %v346 = vld [vmem:[%s305 + $0x61] sm:$0xff]
      %v347 = vld [vmem:[%s305 + $0x69] sm:$0xff]
      %v348 = vld [vmem:[%s305 + $0x79] sm:$0xff]
      %v349 = vld [vmem:[%s305 + $0x81] sm:$0xff]
      %v350 = vld [vmem:[%s305 + $0x91] sm:$0xff]
      %v351 = vld [vmem:[%s305 + $0x99] sm:$0xff]
      %v352 = vld [vmem:[%s305 + $0xa9] sm:$0xff]
      %v353 = vld [vmem:[%s305 + $0xb1] sm:$0xff]
      %v354 = vld [vmem:[%s305 + $0xc1] sm:$0xff]
      %v355 = vld [vmem:[%s305 + $0xc9] sm:$0xff]
      %v356 = vld [vmem:[%s305 + $0xd9] sm:$0xff]
      %v357 = vld [vmem:[%s305 + $0xe1] sm:$0xff]
      %v358 = vld [vmem:[%s305 + $0xf1] sm:$0xff]
      %v359 = vld [vmem:[%s305 + $0xf9] sm:$0xff]
      %v360 = vld [vmem:[%s305 + $0x109] sm:$0xff]
      %v361 = vld [vmem:[%s305 + $0x111] sm:$0xff]
      %v362 = vld [vmem:[%s305 + $0x121] sm:$0xff]
      %v363 = vld [vmem:[%s305 + $0x129] sm:$0xff]
      %v364 = vld [vmem:[%s305 + $0x139] sm:$0xff]
      %v365 = vld [vmem:[%s305 + $0x141] sm:$0xff]
      %v366 = vld [vmem:[%s305 + $0x151] sm:$0xff]
      %v367 = vld [vmem:[%s305 + $0x159] sm:$0xff]
      %v368 = vld [vmem:[%s305 + $0x169] sm:$0xff]
      %v369 = vld [vmem:[%s305 + $0x171] sm:$0xff]
      %v370 = vld [vmem:[%s305 + $0x2] sm:$0xff]
      %v371 = vld [vmem:[%s305 + $0xa] sm:$0xff]
      %v372 = vld [vmem:[%s305 + $0x1a] sm:$0xff]
      %v373 = vld [vmem:[%s305 + $0x22] sm:$0xff]
      %v374 = vld [vmem:[%s305 + $0x32] sm:$0xff]
      %v375 = vld [vmem:[%s305 + $0x3a] sm:$0xff]
      %v376 = vld [vmem:[%s305 + $0x4a] sm:$0xff]
      %v377 = vld [vmem:[%s305 + $0x52] sm:$0xff]
      %v378 = vld [vmem:[%s305 + $0x62] sm:$0xff]
      %v379 = vld [vmem:[%s305 + $0x6a] sm:$0xff]
      %v380 = vld [vmem:[%s305 + $0x7a] sm:$0xff]
      %v381 = vld [vmem:[%s305 + $0x82] sm:$0xff]
      %v382 = vld [vmem:[%s305 + $0x92] sm:$0xff]
      %v383 = vld [vmem:[%s305 + $0x9a] sm:$0xff]
      %v384 = vld [vmem:[%s305 + $0xaa] sm:$0xff]
      %v385 = vld [vmem:[%s305 + $0xb2] sm:$0xff]
      %v386 = vld [vmem:[%s305 + $0xc2] sm:$0xff]
      %v387 = vld [vmem:[%s305 + $0xca] sm:$0xff]
      %v388 = vld [vmem:[%s305 + $0xda] sm:$0xff]
      %v389 = vld [vmem:[%s305 + $0xe2] sm:$0xff]
      %v390 = vld [vmem:[%s305 + $0xf2] sm:$0xff]
      %v391 = vld [vmem:[%s305 + $0xfa] sm:$0xff]
      %v392 = vld [vmem:[%s305 + $0x10a] sm:$0xff]
      %v393 = vld [vmem:[%s305 + $0x112] sm:$0xff]
      %v394 = vld [vmem:[%s305 + $0x122] sm:$0xff]
      %v395 = vld [vmem:[%s305 + $0x12a] sm:$0xff]
      %v396 = vld [vmem:[%s305 + $0x13a] sm:$0xff]
      %v397 = vld [vmem:[%s305 + $0x142] sm:$0xff]
      %v398 = vld [vmem:[%s305 + $0x152] sm:$0xff]
      %v399 = vld [vmem:[%s305 + $0x15a] sm:$0xff]
      %v400 = vld [vmem:[%s305 + $0x16a] sm:$0xff]
      %v401 = vld [vmem:[%s305 + $0x172] sm:$0xff]
      %s402 = sadd.s32 %s204, 2
      %s403 = smul.u32 %s402, 24
      %s404 = scalar_lea.vmem %s190, %s403
      %v405 = vld [vmem:[%s404] sm:$0xff]
      %v406 = vld [vmem:[%s404 + $0x8] sm:$0xff]
      %v407 = vld [vmem:[%s404 + $0x18] sm:$0xff]
      %v408 = vld [vmem:[%s404 + $0x20] sm:$0xff]
      %v409 = vld [vmem:[%s404 + $0x30] sm:$0xff]
      %v410 = vld [vmem:[%s404 + $0x38] sm:$0xff]
      %v411 = vld [vmem:[%s404 + $0x48] sm:$0xff]
      %v412 = vld [vmem:[%s404 + $0x50] sm:$0xff]
      %v413 = vld [vmem:[%s404 + $0x60] sm:$0xff]
      %v414 = vld [vmem:[%s404 + $0x68] sm:$0xff]
      %v415 = vld [vmem:[%s404 + $0x78] sm:$0xff]
      %v416 = vld [vmem:[%s404 + $0x80] sm:$0xff]
      %v417 = vld [vmem:[%s404 + $0x90] sm:$0xff]
      %v418 = vld [vmem:[%s404 + $0x98] sm:$0xff]
      %v419 = vld [vmem:[%s404 + $0xa8] sm:$0xff]
      %v420 = vld [vmem:[%s404 + $0xb0] sm:$0xff]
      %v421 = vld [vmem:[%s404 + $0xc0] sm:$0xff]
      %v422 = vld [vmem:[%s404 + $0xc8] sm:$0xff]
      %v423 = vld [vmem:[%s404 + $0xd8] sm:$0xff]
      %v424 = vld [vmem:[%s404 + $0xe0] sm:$0xff]
      %v425 = vld [vmem:[%s404 + $0xf0] sm:$0xff]
      %v426 = vld [vmem:[%s404 + $0xf8] sm:$0xff]
      %v427 = vld [vmem:[%s404 + $0x108] sm:$0xff]
      %v428 = vld [vmem:[%s404 + $0x110] sm:$0xff]
      %v429 = vld [vmem:[%s404 + $0x120] sm:$0xff]
      %v430 = vld [vmem:[%s404 + $0x128] sm:$0xff]
      %v431 = vld [vmem:[%s404 + $0x138] sm:$0xff]
      %v432 = vld [vmem:[%s404 + $0x140] sm:$0xff]
      %v433 = vld [vmem:[%s404 + $0x150] sm:$0xff]
      %v434 = vld [vmem:[%s404 + $0x158] sm:$0xff]
      %v435 = vld [vmem:[%s404 + $0x168] sm:$0xff]
      %v436 = vld [vmem:[%s404 + $0x170] sm:$0xff]
      %v437 = vld [vmem:[%s404 + $0x1] sm:$0xff]
      %v438 = vld [vmem:[%s404 + $0x9] sm:$0xff]
      %v439 = vld [vmem:[%s404 + $0x19] sm:$0xff]
      %v440 = vld [vmem:[%s404 + $0x21] sm:$0xff]
      %v441 = vld [vmem:[%s404 + $0x31] sm:$0xff]
      %v442 = vld [vmem:[%s404 + $0x39] sm:$0xff]
      %v443 = vld [vmem:[%s404 + $0x49] sm:$0xff]
      %v444 = vld [vmem:[%s404 + $0x51] sm:$0xff]
      %v445 = vld [vmem:[%s404 + $0x61] sm:$0xff]
      %v446 = vld [vmem:[%s404 + $0x69] sm:$0xff]
      %v447 = vld [vmem:[%s404 + $0x79] sm:$0xff]
      %v448 = vld [vmem:[%s404 + $0x81] sm:$0xff]
      %v449 = vld [vmem:[%s404 + $0x91] sm:$0xff]
      %v450 = vld [vmem:[%s404 + $0x99] sm:$0xff]
      %v451 = vld [vmem:[%s404 + $0xa9] sm:$0xff]
      %v452 = vld [vmem:[%s404 + $0xb1] sm:$0xff]
      %v453 = vld [vmem:[%s404 + $0xc1] sm:$0xff]
      %v454 = vld [vmem:[%s404 + $0xc9] sm:$0xff]
      %v455 = vld [vmem:[%s404 + $0xd9] sm:$0xff]
      %v456 = vld [vmem:[%s404 + $0xe1] sm:$0xff]
      %v457 = vld [vmem:[%s404 + $0xf1] sm:$0xff]
      %v458 = vld [vmem:[%s404 + $0xf9] sm:$0xff]
      %v459 = vld [vmem:[%s404 + $0x109] sm:$0xff]
      %v460 = vld [vmem:[%s404 + $0x111] sm:$0xff]
      %v461 = vld [vmem:[%s404 + $0x121] sm:$0xff]
      %v462 = vld [vmem:[%s404 + $0x129] sm:$0xff]
      %v463 = vld [vmem:[%s404 + $0x139] sm:$0xff]
      %v464 = vld [vmem:[%s404 + $0x141] sm:$0xff]
      %v465 = vld [vmem:[%s404 + $0x151] sm:$0xff]
      %v466 = vld [vmem:[%s404 + $0x159] sm:$0xff]
      %v467 = vld [vmem:[%s404 + $0x169] sm:$0xff]
      %v468 = vld [vmem:[%s404 + $0x171] sm:$0xff]
      %v469 = vld [vmem:[%s404 + $0x2] sm:$0xff]
      %v470 = vld [vmem:[%s404 + $0xa] sm:$0xff]
      %v471 = vld [vmem:[%s404 + $0x1a] sm:$0xff]
      %v472 = vld [vmem:[%s404 + $0x22] sm:$0xff]
      %v473 = vld [vmem:[%s404 + $0x32] sm:$0xff]
      %v474 = vld [vmem:[%s404 + $0x3a] sm:$0xff]
      %v475 = vld [vmem:[%s404 + $0x4a] sm:$0xff]
      %v476 = vld [vmem:[%s404 + $0x52] sm:$0xff]
      %v477 = vld [vmem:[%s404 + $0x62] sm:$0xff]
      %v478 = vld [vmem:[%s404 + $0x6a] sm:$0xff]
      %v479 = vld [vmem:[%s404 + $0x7a] sm:$0xff]
      %v480 = vld [vmem:[%s404 + $0x82] sm:$0xff]
      %v481 = vld [vmem:[%s404 + $0x92] sm:$0xff]
      %v482 = vld [vmem:[%s404 + $0x9a] sm:$0xff]
      %v483 = vld [vmem:[%s404 + $0xaa] sm:$0xff]
      %v484 = vld [vmem:[%s404 + $0xb2] sm:$0xff]
      %v485 = vld [vmem:[%s404 + $0xc2] sm:$0xff]
      %v486 = vld [vmem:[%s404 + $0xca] sm:$0xff]
      %v487 = vld [vmem:[%s404 + $0xda] sm:$0xff]
      %v488 = vld [vmem:[%s404 + $0xe2] sm:$0xff]
      %v489 = vld [vmem:[%s404 + $0xf2] sm:$0xff]
      %v490 = vld [vmem:[%s404 + $0xfa] sm:$0xff]
      %v491 = vld [vmem:[%s404 + $0x10a] sm:$0xff]
      %v492 = vld [vmem:[%s404 + $0x112] sm:$0xff]
      %v493 = vld [vmem:[%s404 + $0x122] sm:$0xff]
      %v494 = vld [vmem:[%s404 + $0x12a] sm:$0xff]
      %v495 = vld [vmem:[%s404 + $0x13a] sm:$0xff]
      %v496 = vld [vmem:[%s404 + $0x142] sm:$0xff]
      %v497 = vld [vmem:[%s404 + $0x152] sm:$0xff]
      %v498 = vld [vmem:[%s404 + $0x15a] sm:$0xff]
      %v499 = vld [vmem:[%s404 + $0x16a] sm:$0xff]
      %v500 = vld [vmem:[%s404 + $0x172] sm:$0xff]
      %533 = vrot.lane.b32.xlu0 %v239, 4
      %v534 = vpop.permute.xlu0 %533
      %535 = vrot.lane.b32.xlu0 %v240, 4
      %v536 = vpop.permute.xlu0 %535
      %537 = vrot.lane.b32.xlu0 %v241, 4
      %v538 = vpop.permute.xlu0 %537
      %539 = vrot.lane.b32.xlu0 %v242, 4
      %v540 = vpop.permute.xlu0 %539
      %541 = vrot.lane.b32.xlu0 %v243, 4
      %v542 = vpop.permute.xlu0 %541
      %543 = vrot.lane.b32.xlu0 %v244, 4
      %v544 = vpop.permute.xlu0 %543
      %545 = vrot.lane.b32.xlu0 %v245, 4
      %v546 = vpop.permute.xlu0 %545
      %547 = vrot.lane.b32.xlu0 %v246, 4
      %v548 = vpop.permute.xlu0 %547
      %549 = vrot.lane.b32.xlu0 %v247, 4
      %v550 = vpop.permute.xlu0 %549
      %551 = vrot.lane.b32.xlu0 %v248, 4
      %v552 = vpop.permute.xlu0 %551
      %553 = vrot.lane.b32.xlu0 %v249, 4
      %v554 = vpop.permute.xlu0 %553
      %555 = vrot.lane.b32.xlu0 %v250, 4
      %v556 = vpop.permute.xlu0 %555
      %557 = vrot.lane.b32.xlu0 %v251, 4
      %v558 = vpop.permute.xlu0 %557
      %559 = vrot.lane.b32.xlu0 %v252, 4
      %v560 = vpop.permute.xlu0 %559
      %561 = vrot.lane.b32.xlu0 %v253, 4
      %v562 = vpop.permute.xlu0 %561
      %563 = vrot.lane.b32.xlu0 %v254, 4
      %v564 = vpop.permute.xlu0 %563
      %565 = vrot.lane.b32.xlu0 %v255, 4
      %v566 = vpop.permute.xlu0 %565
      %567 = vrot.lane.b32.xlu0 %v256, 4
      %v568 = vpop.permute.xlu0 %567
      %569 = vrot.lane.b32.xlu0 %v257, 4
      %v570 = vpop.permute.xlu0 %569
      %571 = vrot.lane.b32.xlu0 %v258, 4
      %v572 = vpop.permute.xlu0 %571
      %573 = vrot.lane.b32.xlu0 %v259, 4
      %v574 = vpop.permute.xlu0 %573
      %575 = vrot.lane.b32.xlu0 %v260, 4
      %v576 = vpop.permute.xlu0 %575
      %577 = vrot.lane.b32.xlu0 %v261, 4
      %v578 = vpop.permute.xlu0 %577
      %579 = vrot.lane.b32.xlu0 %v262, 4
      %v580 = vpop.permute.xlu0 %579
      %581 = vrot.lane.b32.xlu0 %v263, 4
      %v582 = vpop.permute.xlu0 %581
      %583 = vrot.lane.b32.xlu0 %v264, 4
      %v584 = vpop.permute.xlu0 %583
      %585 = vrot.lane.b32.xlu0 %v265, 4
      %v586 = vpop.permute.xlu0 %585
      %587 = vrot.lane.b32.xlu0 %v266, 4
      %v588 = vpop.permute.xlu0 %587
      %589 = vrot.lane.b32.xlu0 %v267, 4
      %v590 = vpop.permute.xlu0 %589
      %591 = vrot.lane.b32.xlu0 %v268, 4
      %v592 = vpop.permute.xlu0 %591
      %593 = vrot.lane.b32.xlu0 %v269, 4
      %v594 = vpop.permute.xlu0 %593
      %595 = vrot.lane.b32.xlu0 %v270, 4
      %v596 = vpop.permute.xlu0 %595
      %661 = vrot.lane.b32.xlu0 %v271, 8
      %v662 = vpop.permute.xlu0 %661
      %663 = vrot.lane.b32.xlu0 %v272, 8
      %v664 = vpop.permute.xlu0 %663
      %665 = vrot.lane.b32.xlu0 %v273, 8
      %v666 = vpop.permute.xlu0 %665
      %667 = vrot.lane.b32.xlu0 %v274, 8
      %v668 = vpop.permute.xlu0 %667
      %669 = vrot.lane.b32.xlu0 %v275, 8
      %v670 = vpop.permute.xlu0 %669
      %671 = vrot.lane.b32.xlu0 %v276, 8
      %v672 = vpop.permute.xlu0 %671
      %673 = vrot.lane.b32.xlu0 %v277, 8
      %v674 = vpop.permute.xlu0 %673
      %675 = vrot.lane.b32.xlu0 %v278, 8
      %v676 = vpop.permute.xlu0 %675
      %677 = vrot.lane.b32.xlu0 %v279, 8
      %v678 = vpop.permute.xlu0 %677
      %679 = vrot.lane.b32.xlu0 %v280, 8
      %v680 = vpop.permute.xlu0 %679
      %681 = vrot.lane.b32.xlu0 %v281, 8
      %v682 = vpop.permute.xlu0 %681
      %683 = vrot.lane.b32.xlu0 %v282, 8
      %v684 = vpop.permute.xlu0 %683
      %685 = vrot.lane.b32.xlu0 %v283, 8
      %v686 = vpop.permute.xlu0 %685
      %687 = vrot.lane.b32.xlu0 %v284, 8
      %v688 = vpop.permute.xlu0 %687
      %689 = vrot.lane.b32.xlu0 %v285, 8
      %v690 = vpop.permute.xlu0 %689
      %691 = vrot.lane.b32.xlu0 %v286, 8
      %v692 = vpop.permute.xlu0 %691
      %693 = vrot.lane.b32.xlu0 %v287, 8
      %v694 = vpop.permute.xlu0 %693
      %695 = vrot.lane.b32.xlu0 %v288, 8
      %v696 = vpop.permute.xlu0 %695
      %697 = vrot.lane.b32.xlu0 %v289, 8
      %v698 = vpop.permute.xlu0 %697
      %699 = vrot.lane.b32.xlu0 %v290, 8
      %v700 = vpop.permute.xlu0 %699
      %701 = vrot.lane.b32.xlu0 %v291, 8
      %v702 = vpop.permute.xlu0 %701
      %703 = vrot.lane.b32.xlu0 %v292, 8
      %v704 = vpop.permute.xlu0 %703
      %705 = vrot.lane.b32.xlu0 %v293, 8
      %v706 = vpop.permute.xlu0 %705
      %707 = vrot.lane.b32.xlu0 %v294, 8
      %v708 = vpop.permute.xlu0 %707
      %709 = vrot.lane.b32.xlu0 %v295, 8
      %v710 = vpop.permute.xlu0 %709
      %711 = vrot.lane.b32.xlu0 %v296, 8
      %v712 = vpop.permute.xlu0 %711
      %713 = vrot.lane.b32.xlu0 %v297, 8
      %v714 = vpop.permute.xlu0 %713
      %715 = vrot.lane.b32.xlu0 %v298, 8
      %v716 = vpop.permute.xlu0 %715
      %717 = vrot.lane.b32.xlu0 %v299, 8
      %v718 = vpop.permute.xlu0 %717
      %719 = vrot.lane.b32.xlu0 %v300, 8
      %v720 = vpop.permute.xlu0 %719
      %721 = vrot.lane.b32.xlu0 %v301, 8
      %v722 = vpop.permute.xlu0 %721
      %723 = vrot.lane.b32.xlu0 %v302, 8
      %v724 = vpop.permute.xlu0 %723
      %789 = vrot.lane.b32.xlu0 %v306, 12
      %v790 = vpop.permute.xlu0 %789
      %791 = vrot.lane.b32.xlu0 %v307, 12
      %v792 = vpop.permute.xlu0 %791
      %793 = vrot.lane.b32.xlu0 %v308, 12
      %v794 = vpop.permute.xlu0 %793
      %795 = vrot.lane.b32.xlu0 %v309, 12
      %v796 = vpop.permute.xlu0 %795
      %797 = vrot.lane.b32.xlu0 %v310, 12
      %v798 = vpop.permute.xlu0 %797
      %799 = vrot.lane.b32.xlu0 %v311, 12
      %v800 = vpop.permute.xlu0 %799
      %801 = vrot.lane.b32.xlu0 %v312, 12
      %v802 = vpop.permute.xlu0 %801
      %803 = vrot.lane.b32.xlu0 %v313, 12
      %v804 = vpop.permute.xlu0 %803
      %805 = vrot.lane.b32.xlu0 %v314, 12
      %v806 = vpop.permute.xlu0 %805
      %807 = vrot.lane.b32.xlu0 %v315, 12
      %v808 = vpop.permute.xlu0 %807
      %809 = vrot.lane.b32.xlu0 %v316, 12
      %v810 = vpop.permute.xlu0 %809
      %811 = vrot.lane.b32.xlu0 %v317, 12
      %v812 = vpop.permute.xlu0 %811
      %813 = vrot.lane.b32.xlu0 %v318, 12
      %v814 = vpop.permute.xlu0 %813
      %815 = vrot.lane.b32.xlu0 %v319, 12
      %v816 = vpop.permute.xlu0 %815
      %817 = vrot.lane.b32.xlu0 %v320, 12
      %v818 = vpop.permute.xlu0 %817
      %819 = vrot.lane.b32.xlu0 %v321, 12
      %v820 = vpop.permute.xlu0 %819
      %821 = vrot.lane.b32.xlu0 %v322, 12
      %v822 = vpop.permute.xlu0 %821
      %823 = vrot.lane.b32.xlu0 %v323, 12
      %v824 = vpop.permute.xlu0 %823
      %825 = vrot.lane.b32.xlu0 %v324, 12
      %v826 = vpop.permute.xlu0 %825
      %827 = vrot.lane.b32.xlu0 %v325, 12
      %v828 = vpop.permute.xlu0 %827
      %829 = vrot.lane.b32.xlu0 %v326, 12
      %v830 = vpop.permute.xlu0 %829
      %831 = vrot.lane.b32.xlu0 %v327, 12
      %v832 = vpop.permute.xlu0 %831
      %833 = vrot.lane.b32.xlu0 %v328, 12
      %v834 = vpop.permute.xlu0 %833
      %835 = vrot.lane.b32.xlu0 %v329, 12
      %v836 = vpop.permute.xlu0 %835
      %837 = vrot.lane.b32.xlu0 %v330, 12
      %v838 = vpop.permute.xlu0 %837
      %839 = vrot.lane.b32.xlu0 %v331, 12
      %v840 = vpop.permute.xlu0 %839
      %841 = vrot.lane.b32.xlu0 %v332, 12
      %v842 = vpop.permute.xlu0 %841
      %843 = vrot.lane.b32.xlu0 %v333, 12
      %v844 = vpop.permute.xlu0 %843
      %845 = vrot.lane.b32.xlu0 %v334, 12
      %v846 = vpop.permute.xlu0 %845
      %847 = vrot.lane.b32.xlu0 %v335, 12
      %v848 = vpop.permute.xlu0 %847
      %849 = vrot.lane.b32.xlu0 %v336, 12
      %v850 = vpop.permute.xlu0 %849
      %851 = vrot.lane.b32.xlu0 %v337, 12
      %v852 = vpop.permute.xlu0 %851
      %917 = vrot.lane.b32.xlu0 %v338, 16
      %v918 = vpop.permute.xlu0 %917
      %919 = vrot.lane.b32.xlu0 %v339, 16
      %v920 = vpop.permute.xlu0 %919
      %921 = vrot.lane.b32.xlu0 %v340, 16
      %v922 = vpop.permute.xlu0 %921
      %923 = vrot.lane.b32.xlu0 %v341, 16
      %v924 = vpop.permute.xlu0 %923
      %925 = vrot.lane.b32.xlu0 %v342, 16
      %v926 = vpop.permute.xlu0 %925
      %927 = vrot.lane.b32.xlu0 %v343, 16
      %v928 = vpop.permute.xlu0 %927
      %929 = vrot.lane.b32.xlu0 %v344, 16
      %v930 = vpop.permute.xlu0 %929
      %931 = vrot.lane.b32.xlu0 %v345, 16
      %v932 = vpop.permute.xlu0 %931
      %933 = vrot.lane.b32.xlu0 %v346, 16
      %v934 = vpop.permute.xlu0 %933
      %935 = vrot.lane.b32.xlu0 %v347, 16
      %v936 = vpop.permute.xlu0 %935
      %937 = vrot.lane.b32.xlu0 %v348, 16
      %v938 = vpop.permute.xlu0 %937
      %939 = vrot.lane.b32.xlu0 %v349, 16
      %v940 = vpop.permute.xlu0 %939
      %941 = vrot.lane.b32.xlu0 %v350, 16
      %v942 = vpop.permute.xlu0 %941
      %943 = vrot.lane.b32.xlu0 %v351, 16
      %v944 = vpop.permute.xlu0 %943
      %945 = vrot.lane.b32.xlu0 %v352, 16
      %v946 = vpop.permute.xlu0 %945
      %947 = vrot.lane.b32.xlu0 %v353, 16
      %v948 = vpop.permute.xlu0 %947
      %949 = vrot.lane.b32.xlu0 %v354, 16
      %v950 = vpop.permute.xlu0 %949
      %951 = vrot.lane.b32.xlu0 %v355, 16
      %v952 = vpop.permute.xlu0 %951
      %953 = vrot.lane.b32.xlu0 %v356, 16
      %v954 = vpop.permute.xlu0 %953
      %955 = vrot.lane.b32.xlu0 %v357, 16
      %v956 = vpop.permute.xlu0 %955
      %957 = vrot.lane.b32.xlu0 %v358, 16
      %v958 = vpop.permute.xlu0 %957
      %959 = vrot.lane.b32.xlu0 %v359, 16
      %v960 = vpop.permute.xlu0 %959
      %961 = vrot.lane.b32.xlu0 %v360, 16
      %v962 = vpop.permute.xlu0 %961
      %963 = vrot.lane.b32.xlu0 %v361, 16
      %v964 = vpop.permute.xlu0 %963
      %965 = vrot.lane.b32.xlu0 %v362, 16
      %v966 = vpop.permute.xlu0 %965
      %967 = vrot.lane.b32.xlu0 %v363, 16
      %v968 = vpop.permute.xlu0 %967
      %969 = vrot.lane.b32.xlu0 %v364, 16
      %v970 = vpop.permute.xlu0 %969
      %971 = vrot.lane.b32.xlu0 %v365, 16
      %v972 = vpop.permute.xlu0 %971
      %973 = vrot.lane.b32.xlu0 %v366, 16
      %v974 = vpop.permute.xlu0 %973
      %975 = vrot.lane.b32.xlu0 %v367, 16
      %v976 = vpop.permute.xlu0 %975
      %977 = vrot.lane.b32.xlu0 %v368, 16
      %v978 = vpop.permute.xlu0 %977
      %979 = vrot.lane.b32.xlu0 %v369, 16
      %v980 = vpop.permute.xlu0 %979
      %1045 = vrot.lane.b32.xlu0 %v370, 20
      %v1046 = vpop.permute.xlu0 %1045
      %1047 = vrot.lane.b32.xlu0 %v371, 20
      %v1048 = vpop.permute.xlu0 %1047
      %1049 = vrot.lane.b32.xlu0 %v372, 20
      %v1050 = vpop.permute.xlu0 %1049
      %1051 = vrot.lane.b32.xlu0 %v373, 20
      %v1052 = vpop.permute.xlu0 %1051
      %1053 = vrot.lane.b32.xlu0 %v374, 20
      %v1054 = vpop.permute.xlu0 %1053
      %1055 = vrot.lane.b32.xlu0 %v375, 20
      %v1056 = vpop.permute.xlu0 %1055
      %1057 = vrot.lane.b32.xlu0 %v376, 20
      %v1058 = vpop.permute.xlu0 %1057
      %1059 = vrot.lane.b32.xlu0 %v377, 20
      %v1060 = vpop.permute.xlu0 %1059
      %1061 = vrot.lane.b32.xlu0 %v378, 20
      %v1062 = vpop.permute.xlu0 %1061
      %1063 = vrot.lane.b32.xlu0 %v379, 20
      %v1064 = vpop.permute.xlu0 %1063
      %1065 = vrot.lane.b32.xlu0 %v380, 20
      %v1066 = vpop.permute.xlu0 %1065
      %1067 = vrot.lane.b32.xlu0 %v381, 20
      %v1068 = vpop.permute.xlu0 %1067
      %1069 = vrot.lane.b32.xlu0 %v382, 20
      %v1070 = vpop.permute.xlu0 %1069
      %1071 = vrot.lane.b32.xlu0 %v383, 20
      %v1072 = vpop.permute.xlu0 %1071
      %1073 = vrot.lane.b32.xlu0 %v384, 20
      %v1074 = vpop.permute.xlu0 %1073
      %1075 = vrot.lane.b32.xlu0 %v385, 20
      %v1076 = vpop.permute.xlu0 %1075
      %1077 = vrot.lane.b32.xlu0 %v386, 20
      %v1078 = vpop.permute.xlu0 %1077
      %1079 = vrot.lane.b32.xlu0 %v387, 20
      %v1080 = vpop.permute.xlu0 %1079
      %1081 = vrot.lane.b32.xlu0 %v388, 20
      %v1082 = vpop.permute.xlu0 %1081
      %1083 = vrot.lane.b32.xlu0 %v389, 20
      %v1084 = vpop.permute.xlu0 %1083
      %1085 = vrot.lane.b32.xlu0 %v390, 20
      %v1086 = vpop.permute.xlu0 %1085
      %1087 = vrot.lane.b32.xlu0 %v391, 20
      %v1088 = vpop.permute.xlu0 %1087
      %1089 = vrot.lane.b32.xlu0 %v392, 20
      %v1090 = vpop.permute.xlu0 %1089
      %1091 = vrot.lane.b32.xlu0 %v393, 20
      %v1092 = vpop.permute.xlu0 %1091
      %1093 = vrot.lane.b32.xlu0 %v394, 20
      %v1094 = vpop.permute.xlu0 %1093
      %1095 = vrot.lane.b32.xlu0 %v395, 20
      %v1096 = vpop.permute.xlu0 %1095
      %1097 = vrot.lane.b32.xlu0 %v396, 20
      %v1098 = vpop.permute.xlu0 %1097
      %1099 = vrot.lane.b32.xlu0 %v397, 20
      %v1100 = vpop.permute.xlu0 %1099
      %1101 = vrot.lane.b32.xlu0 %v398, 20
      %v1102 = vpop.permute.xlu0 %1101
      %1103 = vrot.lane.b32.xlu0 %v399, 20
      %v1104 = vpop.permute.xlu0 %1103
      %1105 = vrot.lane.b32.xlu0 %v400, 20
      %v1106 = vpop.permute.xlu0 %1105
      %1107 = vrot.lane.b32.xlu0 %v401, 20
      %v1108 = vpop.permute.xlu0 %1107
      %1173 = vrot.lane.b32.xlu0 %v405, 24
      %v1174 = vpop.permute.xlu0 %1173
      %1175 = vrot.lane.b32.xlu0 %v406, 24
      %v1176 = vpop.permute.xlu0 %1175
      %1177 = vrot.lane.b32.xlu0 %v407, 24
      %v1178 = vpop.permute.xlu0 %1177
      %1179 = vrot.lane.b32.xlu0 %v408, 24
      %v1180 = vpop.permute.xlu0 %1179
      %1181 = vrot.lane.b32.xlu0 %v409, 24
      %v1182 = vpop.permute.xlu0 %1181
      %1183 = vrot.lane.b32.xlu0 %v410, 24
      %v1184 = vpop.permute.xlu0 %1183
      %1185 = vrot.lane.b32.xlu0 %v411, 24
      %v1186 = vpop.permute.xlu0 %1185
      %1187 = vrot.lane.b32.xlu0 %v412, 24
      %v1188 = vpop.permute.xlu0 %1187
      %1189 = vrot.lane.b32.xlu0 %v413, 24
      %v1190 = vpop.permute.xlu0 %1189
      %1191 = vrot.lane.b32.xlu0 %v414, 24
      %v1192 = vpop.permute.xlu0 %1191
      %1193 = vrot.lane.b32.xlu0 %v415, 24
      %v1194 = vpop.permute.xlu0 %1193
      %1195 = vrot.lane.b32.xlu0 %v416, 24
      %v1196 = vpop.permute.xlu0 %1195
      %1197 = vrot.lane.b32.xlu0 %v417, 24
      %v1198 = vpop.permute.xlu0 %1197
      %1199 = vrot.lane.b32.xlu0 %v418, 24
      %v1200 = vpop.permute.xlu0 %1199
      %1201 = vrot.lane.b32.xlu0 %v419, 24
      %v1202 = vpop.permute.xlu0 %1201
      %1203 = vrot.lane.b32.xlu0 %v420, 24
      %v1204 = vpop.permute.xlu0 %1203
      %1205 = vrot.lane.b32.xlu0 %v421, 24
      %v1206 = vpop.permute.xlu0 %1205
      %1207 = vrot.lane.b32.xlu0 %v422, 24
      %v1208 = vpop.permute.xlu0 %1207
      %1209 = vrot.lane.b32.xlu0 %v423, 24
      %v1210 = vpop.permute.xlu0 %1209
      %1211 = vrot.lane.b32.xlu0 %v424, 24
      %v1212 = vpop.permute.xlu0 %1211
      %1213 = vrot.lane.b32.xlu0 %v425, 24
      %v1214 = vpop.permute.xlu0 %1213
      %1215 = vrot.lane.b32.xlu0 %v426, 24
      %v1216 = vpop.permute.xlu0 %1215
      %1217 = vrot.lane.b32.xlu0 %v427, 24
      %v1218 = vpop.permute.xlu0 %1217
      %1219 = vrot.lane.b32.xlu0 %v428, 24
      %v1220 = vpop.permute.xlu0 %1219
      %1221 = vrot.lane.b32.xlu0 %v429, 24
      %v1222 = vpop.permute.xlu0 %1221
      %1223 = vrot.lane.b32.xlu0 %v430, 24
      %v1224 = vpop.permute.xlu0 %1223
      %1225 = vrot.lane.b32.xlu0 %v431, 24
      %v1226 = vpop.permute.xlu0 %1225
      %1227 = vrot.lane.b32.xlu0 %v432, 24
      %v1228 = vpop.permute.xlu0 %1227
      %1229 = vrot.lane.b32.xlu0 %v433, 24
      %v1230 = vpop.permute.xlu0 %1229
      %1231 = vrot.lane.b32.xlu0 %v434, 24
      %v1232 = vpop.permute.xlu0 %1231
      %1233 = vrot.lane.b32.xlu0 %v435, 24
      %v1234 = vpop.permute.xlu0 %1233
      %1235 = vrot.lane.b32.xlu0 %v436, 24
      %v1236 = vpop.permute.xlu0 %1235
      %1301 = vrot.lane.b32.xlu0 %v437, 28
      %v1302 = vpop.permute.xlu0 %1301
      %1303 = vrot.lane.b32.xlu0 %v438, 28
      %v1304 = vpop.permute.xlu0 %1303
      %1305 = vrot.lane.b32.xlu0 %v439, 28
      %v1306 = vpop.permute.xlu0 %1305
      %1307 = vrot.lane.b32.xlu0 %v440, 28
      %v1308 = vpop.permute.xlu0 %1307
      %1309 = vrot.lane.b32.xlu0 %v441, 28
      %v1310 = vpop.permute.xlu0 %1309
      %1311 = vrot.lane.b32.xlu0 %v442, 28
      %v1312 = vpop.permute.xlu0 %1311
      %1313 = vrot.lane.b32.xlu0 %v443, 28
      %v1314 = vpop.permute.xlu0 %1313
      %1315 = vrot.lane.b32.xlu0 %v444, 28
      %v1316 = vpop.permute.xlu0 %1315
      %1317 = vrot.lane.b32.xlu0 %v445, 28
      %v1318 = vpop.permute.xlu0 %1317
      %1319 = vrot.lane.b32.xlu0 %v446, 28
      %v1320 = vpop.permute.xlu0 %1319
      %1321 = vrot.lane.b32.xlu0 %v447, 28
      %v1322 = vpop.permute.xlu0 %1321
      %1323 = vrot.lane.b32.xlu0 %v448, 28
      %v1324 = vpop.permute.xlu0 %1323
      %1325 = vrot.lane.b32.xlu0 %v449, 28
      %v1326 = vpop.permute.xlu0 %1325
      %1327 = vrot.lane.b32.xlu0 %v450, 28
      %v1328 = vpop.permute.xlu0 %1327
      %1329 = vrot.lane.b32.xlu0 %v451, 28
      %v1330 = vpop.permute.xlu0 %1329
      %1331 = vrot.lane.b32.xlu0 %v452, 28
      %v1332 = vpop.permute.xlu0 %1331
      %1333 = vrot.lane.b32.xlu0 %v453, 28
      %v1334 = vpop.permute.xlu0 %1333
      %1335 = vrot.lane.b32.xlu0 %v454, 28
      %v1336 = vpop.permute.xlu0 %1335
      %1337 = vrot.lane.b32.xlu0 %v455, 28
      %v1338 = vpop.permute.xlu0 %1337
      %1339 = vrot.lane.b32.xlu0 %v456, 28
      %v1340 = vpop.permute.xlu0 %1339
      %1341 = vrot.lane.b32.xlu0 %v457, 28
      %v1342 = vpop.permute.xlu0 %1341
      %1343 = vrot.lane.b32.xlu0 %v458, 28
      %v1344 = vpop.permute.xlu0 %1343
      %1345 = vrot.lane.b32.xlu0 %v459, 28
      %v1346 = vpop.permute.xlu0 %1345
      %1347 = vrot.lane.b32.xlu0 %v460, 28
      %v1348 = vpop.permute.xlu0 %1347
      %1349 = vrot.lane.b32.xlu0 %v461, 28
      %v1350 = vpop.permute.xlu0 %1349
      %1351 = vrot.lane.b32.xlu0 %v462, 28
      %v1352 = vpop.permute.xlu0 %1351
      %1353 = vrot.lane.b32.xlu0 %v463, 28
      %v1354 = vpop.permute.xlu0 %1353
      %1355 = vrot.lane.b32.xlu0 %v464, 28
      %v1356 = vpop.permute.xlu0 %1355
      %1357 = vrot.lane.b32.xlu0 %v465, 28
      %v1358 = vpop.permute.xlu0 %1357
      %1359 = vrot.lane.b32.xlu0 %v466, 28
      %v1360 = vpop.permute.xlu0 %1359
      %1361 = vrot.lane.b32.xlu0 %v467, 28
      %v1362 = vpop.permute.xlu0 %1361
      %1363 = vrot.lane.b32.xlu0 %v468, 28
      %v1364 = vpop.permute.xlu0 %1363
      %1429 = vrot.lane.b32.xlu0 %v469, 32
      %v1430 = vpop.permute.xlu0 %1429
      %1431 = vrot.lane.b32.xlu0 %v470, 32
      %v1432 = vpop.permute.xlu0 %1431
      %1433 = vrot.lane.b32.xlu0 %v471, 32
      %v1434 = vpop.permute.xlu0 %1433
      %1435 = vrot.lane.b32.xlu0 %v472, 32
      %v1436 = vpop.permute.xlu0 %1435
      %1437 = vrot.lane.b32.xlu0 %v473, 32
      %v1438 = vpop.permute.xlu0 %1437
      %1439 = vrot.lane.b32.xlu0 %v474, 32
      %v1440 = vpop.permute.xlu0 %1439
      %1441 = vrot.lane.b32.xlu0 %v475, 32
      %v1442 = vpop.permute.xlu0 %1441
      %1443 = vrot.lane.b32.xlu0 %v476, 32
      %v1444 = vpop.permute.xlu0 %1443
      %1445 = vrot.lane.b32.xlu0 %v477, 32
      %v1446 = vpop.permute.xlu0 %1445
      %1447 = vrot.lane.b32.xlu0 %v478, 32
      %v1448 = vpop.permute.xlu0 %1447
      %1449 = vrot.lane.b32.xlu0 %v479, 32
      %v1450 = vpop.permute.xlu0 %1449
      %1451 = vrot.lane.b32.xlu0 %v480, 32
      %v1452 = vpop.permute.xlu0 %1451
      %1453 = vrot.lane.b32.xlu0 %v481, 32
      %v1454 = vpop.permute.xlu0 %1453
      %1455 = vrot.lane.b32.xlu0 %v482, 32
      %v1456 = vpop.permute.xlu0 %1455
      %1457 = vrot.lane.b32.xlu0 %v483, 32
      %v1458 = vpop.permute.xlu0 %1457
      %1459 = vrot.lane.b32.xlu0 %v484, 32
      %v1460 = vpop.permute.xlu0 %1459
      %1461 = vrot.lane.b32.xlu0 %v485, 32
      %v1462 = vpop.permute.xlu0 %1461
      %1463 = vrot.lane.b32.xlu0 %v486, 32
      %v1464 = vpop.permute.xlu0 %1463
      %1465 = vrot.lane.b32.xlu0 %v487, 32
      %v1466 = vpop.permute.xlu0 %1465
      %1467 = vrot.lane.b32.xlu0 %v488, 32
      %v1468 = vpop.permute.xlu0 %1467
      %1469 = vrot.lane.b32.xlu0 %v489, 32
      %v1470 = vpop.permute.xlu0 %1469
      %1471 = vrot.lane.b32.xlu0 %v490, 32
      %v1472 = vpop.permute.xlu0 %1471
      %1473 = vrot.lane.b32.xlu0 %v491, 32
      %v1474 = vpop.permute.xlu0 %1473
      %1475 = vrot.lane.b32.xlu0 %v492, 32
      %v1476 = vpop.permute.xlu0 %1475
      %1477 = vrot.lane.b32.xlu0 %v493, 32
      %v1478 = vpop.permute.xlu0 %1477
      %1479 = vrot.lane.b32.xlu0 %v494, 32
      %v1480 = vpop.permute.xlu0 %1479
      %1481 = vrot.lane.b32.xlu0 %v495, 32
      %v1482 = vpop.permute.xlu0 %1481
      %1483 = vrot.lane.b32.xlu0 %v496, 32
      %v1484 = vpop.permute.xlu0 %1483
      %1485 = vrot.lane.b32.xlu0 %v497, 32
      %v1486 = vpop.permute.xlu0 %1485
      %1487 = vrot.lane.b32.xlu0 %v498, 32
      %v1488 = vpop.permute.xlu0 %1487
      %1489 = vrot.lane.b32.xlu0 %v499, 32
      %v1490 = vpop.permute.xlu0 %1489
      %1491 = vrot.lane.b32.xlu0 %v500, 32
      %v1492 = vpop.permute.xlu0 %1491
      %vm1525 = vcmask 31744
      %v1526 = vsel %vm1525, %v207, %v534
      %v1527 = vsel %vm1525, %v208, %v536
      %v1528 = vsel %vm1525, %v209, %v538
      %v1529 = vsel %vm1525, %v210, %v540
      %v1530 = vsel %vm1525, %v211, %v542
      %v1531 = vsel %vm1525, %v212, %v544
      %v1532 = vsel %vm1525, %v213, %v546
      %v1533 = vsel %vm1525, %v214, %v548
      %v1534 = vsel %vm1525, %v215, %v550
      %v1535 = vsel %vm1525, %v216, %v552
      %v1536 = vsel %vm1525, %v217, %v554
      %v1537 = vsel %vm1525, %v218, %v556
      %v1538 = vsel %vm1525, %v219, %v558
      %v1539 = vsel %vm1525, %v220, %v560
      %v1540 = vsel %vm1525, %v221, %v562
      %v1541 = vsel %vm1525, %v222, %v564
      %v1542 = vsel %vm1525, %v223, %v566
      %v1543 = vsel %vm1525, %v224, %v568
      %v1544 = vsel %vm1525, %v225, %v570
      %v1545 = vsel %vm1525, %v226, %v572
      %v1546 = vsel %vm1525, %v227, %v574
      %v1547 = vsel %vm1525, %v228, %v576
      %v1548 = vsel %vm1525, %v229, %v578
      %v1549 = vsel %vm1525, %v230, %v580
      %v1550 = vsel %vm1525, %v231, %v582
      %v1551 = vsel %vm1525, %v232, %v584
      %v1552 = vsel %vm1525, %v233, %v586
      %v1553 = vsel %vm1525, %v234, %v588
      %v1554 = vsel %vm1525, %v235, %v590
      %v1555 = vsel %vm1525, %v236, %v592
      %v1556 = vsel %vm1525, %v237, %v594
      %v1557 = vsel %vm1525, %v238, %v596
      %vm1558 = vcmask 64512
      %v1559 = vsel %vm1558, %v1526, %v662
      %v1560 = vsel %vm1558, %v1527, %v664
      %v1561 = vsel %vm1558, %v1528, %v666
      %v1562 = vsel %vm1558, %v1529, %v668
      %v1563 = vsel %vm1558, %v1530, %v670
      %v1564 = vsel %vm1558, %v1531, %v672
      %v1565 = vsel %vm1558, %v1532, %v674
      %v1566 = vsel %vm1558, %v1533, %v676
      %v1567 = vsel %vm1558, %v1534, %v678
      %v1568 = vsel %vm1558, %v1535, %v680
      %v1569 = vsel %vm1558, %v1536, %v682
      %v1570 = vsel %vm1558, %v1537, %v684
      %v1571 = vsel %vm1558, %v1538, %v686
      %v1572 = vsel %vm1558, %v1539, %v688
      %v1573 = vsel %vm1558, %v1540, %v690
      %v1574 = vsel %vm1558, %v1541, %v692
      %v1575 = vsel %vm1558, %v1542, %v694
      %v1576 = vsel %vm1558, %v1543, %v696
      %v1577 = vsel %vm1558, %v1544, %v698
      %v1578 = vsel %vm1558, %v1545, %v700
      %v1579 = vsel %vm1558, %v1546, %v702
      %v1580 = vsel %vm1558, %v1547, %v704
      %v1581 = vsel %vm1558, %v1548, %v706
      %v1582 = vsel %vm1558, %v1549, %v708
      %v1583 = vsel %vm1558, %v1550, %v710
      %v1584 = vsel %vm1558, %v1551, %v712
      %v1585 = vsel %vm1558, %v1552, %v714
      %v1586 = vsel %vm1558, %v1553, %v716
      %v1587 = vsel %vm1558, %v1554, %v718
      %v1588 = vsel %vm1558, %v1555, %v720
      %v1589 = vsel %vm1558, %v1556, %v722
      %v1590 = vsel %vm1558, %v1557, %v724
      %vm1591 = vcmask 97280
      %v1592 = vsel %vm1591, %v1559, %v790
      %v1593 = vsel %vm1591, %v1560, %v792
      %v1594 = vsel %vm1591, %v1561, %v794
      %v1595 = vsel %vm1591, %v1562, %v796
      %v1596 = vsel %vm1591, %v1563, %v798
      %v1597 = vsel %vm1591, %v1564, %v800
      %v1598 = vsel %vm1591, %v1565, %v802
      %v1599 = vsel %vm1591, %v1566, %v804
      %v1600 = vsel %vm1591, %v1567, %v806
      %v1601 = vsel %vm1591, %v1568, %v808
      %v1602 = vsel %vm1591, %v1569, %v810
      %v1603 = vsel %vm1591, %v1570, %v812
      %v1604 = vsel %vm1591, %v1571, %v814
      %v1605 = vsel %vm1591, %v1572, %v816
      %v1606 = vsel %vm1591, %v1573, %v818
      %v1607 = vsel %vm1591, %v1574, %v820
      %v1608 = vsel %vm1591, %v1575, %v822
      %v1609 = vsel %vm1591, %v1576, %v824
      %v1610 = vsel %vm1591, %v1577, %v826
      %v1611 = vsel %vm1591, %v1578, %v828
      %v1612 = vsel %vm1591, %v1579, %v830
      %v1613 = vsel %vm1591, %v1580, %v832
      %v1614 = vsel %vm1591, %v1581, %v834
      %v1615 = vsel %vm1591, %v1582, %v836
      %v1616 = vsel %vm1591, %v1583, %v838
      %v1617 = vsel %vm1591, %v1584, %v840
      %v1618 = vsel %vm1591, %v1585, %v842
      %v1619 = vsel %vm1591, %v1586, %v844
      %v1620 = vsel %vm1591, %v1587, %v846
      %v1621 = vsel %vm1591, %v1588, %v848
      %v1622 = vsel %vm1591, %v1589, %v850
      %v1623 = vsel %vm1591, %v1590, %v852
      %vm1624 = vcmask 130048
      %v1625 = vsel %vm1624, %v1592, %v918
      %v1626 = vsel %vm1624, %v1593, %v920
      %v1627 = vsel %vm1624, %v1594, %v922
      %v1628 = vsel %vm1624, %v1595, %v924
      %v1629 = vsel %vm1624, %v1596, %v926
      %v1630 = vsel %vm1624, %v1597, %v928
      %v1631 = vsel %vm1624, %v1598, %v930
      %v1632 = vsel %vm1624, %v1599, %v932
      %v1633 = vsel %vm1624, %v1600, %v934
      %v1634 = vsel %vm1624, %v1601, %v936
      %v1635 = vsel %vm1624, %v1602, %v938
      %v1636 = vsel %vm1624, %v1603, %v940
      %v1637 = vsel %vm1624, %v1604, %v942
      %v1638 = vsel %vm1624, %v1605, %v944
      %v1639 = vsel %vm1624, %v1606, %v946
      %v1640 = vsel %vm1624, %v1607, %v948
      %v1641 = vsel %vm1624, %v1608, %v950
      %v1642 = vsel %vm1624, %v1609, %v952
      %v1643 = vsel %vm1624, %v1610, %v954
      %v1644 = vsel %vm1624, %v1611, %v956
      %v1645 = vsel %vm1624, %v1612, %v958
      %v1646 = vsel %vm1624, %v1613, %v960
      %v1647 = vsel %vm1624, %v1614, %v962
      %v1648 = vsel %vm1624, %v1615, %v964
      %v1649 = vsel %vm1624, %v1616, %v966
      %v1650 = vsel %vm1624, %v1617, %v968
      %v1651 = vsel %vm1624, %v1618, %v970
      %v1652 = vsel %vm1624, %v1619, %v972
      %v1653 = vsel %vm1624, %v1620, %v974
      %v1654 = vsel %vm1624, %v1621, %v976
      %v1655 = vsel %vm1624, %v1622, %v978
      %v1656 = vsel %vm1624, %v1623, %v980
      %vm1657 = vcmask 162816
      %v1658 = vsel %vm1657, %v1625, %v1046
      %v1659 = vsel %vm1657, %v1626, %v1048
      %v1660 = vsel %vm1657, %v1627, %v1050
      %v1661 = vsel %vm1657, %v1628, %v1052
      %v1662 = vsel %vm1657, %v1629, %v1054
      %v1663 = vsel %vm1657, %v1630, %v1056
      %v1664 = vsel %vm1657, %v1631, %v1058
      %v1665 = vsel %vm1657, %v1632, %v1060
      %v1666 = vsel %vm1657, %v1633, %v1062
      %v1667 = vsel %vm1657, %v1634, %v1064
      %v1668 = vsel %vm1657, %v1635, %v1066
      %v1669 = vsel %vm1657, %v1636, %v1068
      %v1670 = vsel %vm1657, %v1637, %v1070
      %v1671 = vsel %vm1657, %v1638, %v1072
      %v1672 = vsel %vm1657, %v1639, %v1074
      %v1673 = vsel %vm1657, %v1640, %v1076
      %v1674 = vsel %vm1657, %v1641, %v1078
      %v1675 = vsel %vm1657, %v1642, %v1080
      %v1676 = vsel %vm1657, %v1643, %v1082
      %v1677 = vsel %vm1657, %v1644, %v1084
      %v1678 = vsel %vm1657, %v1645, %v1086
      %v1679 = vsel %vm1657, %v1646, %v1088
      %v1680 = vsel %vm1657, %v1647, %v1090
      %v1681 = vsel %vm1657, %v1648, %v1092
      %v1682 = vsel %vm1657, %v1649, %v1094
      %v1683 = vsel %vm1657, %v1650, %v1096
      %v1684 = vsel %vm1657, %v1651, %v1098
      %v1685 = vsel %vm1657, %v1652, %v1100
      %v1686 = vsel %vm1657, %v1653, %v1102
      %v1687 = vsel %vm1657, %v1654, %v1104
      %v1688 = vsel %vm1657, %v1655, %v1106
      %v1689 = vsel %vm1657, %v1656, %v1108
      %vm1690 = vcmask 195584
      %v1691 = vsel %vm1690, %v1658, %v1174
      %v1692 = vsel %vm1690, %v1659, %v1176
      %v1693 = vsel %vm1690, %v1660, %v1178
      %v1694 = vsel %vm1690, %v1661, %v1180
      %v1695 = vsel %vm1690, %v1662, %v1182
      %v1696 = vsel %vm1690, %v1663, %v1184
      %v1697 = vsel %vm1690, %v1664, %v1186
      %v1698 = vsel %vm1690, %v1665, %v1188
      %v1699 = vsel %vm1690, %v1666, %v1190
      %v1700 = vsel %vm1690, %v1667, %v1192
      %v1701 = vsel %vm1690, %v1668, %v1194
      %v1702 = vsel %vm1690, %v1669, %v1196
      %v1703 = vsel %vm1690, %v1670, %v1198
      %v1704 = vsel %vm1690, %v1671, %v1200
      %v1705 = vsel %vm1690, %v1672, %v1202
      %v1706 = vsel %vm1690, %v1673, %v1204
      %v1707 = vsel %vm1690, %v1674, %v1206
      %v1708 = vsel %vm1690, %v1675, %v1208
      %v1709 = vsel %vm1690, %v1676, %v1210
      %v1710 = vsel %vm1690, %v1677, %v1212
      %v1711 = vsel %vm1690, %v1678, %v1214
      %v1712 = vsel %vm1690, %v1679, %v1216
      %v1713 = vsel %vm1690, %v1680, %v1218
      %v1714 = vsel %vm1690, %v1681, %v1220
      %v1715 = vsel %vm1690, %v1682, %v1222
      %v1716 = vsel %vm1690, %v1683, %v1224
      %v1717 = vsel %vm1690, %v1684, %v1226
      %v1718 = vsel %vm1690, %v1685, %v1228
      %v1719 = vsel %vm1690, %v1686, %v1230
      %v1720 = vsel %vm1690, %v1687, %v1232
      %v1721 = vsel %vm1690, %v1688, %v1234
      %v1722 = vsel %vm1690, %v1689, %v1236
      %vm1723 = vcmask 228352
      %v1724 = vsel %vm1723, %v1691, %v1302
      %v1725 = vsel %vm1723, %v1692, %v1304
      %v1726 = vsel %vm1723, %v1693, %v1306
      %v1727 = vsel %vm1723, %v1694, %v1308
      %v1728 = vsel %vm1723, %v1695, %v1310
      %v1729 = vsel %vm1723, %v1696, %v1312
      %v1730 = vsel %vm1723, %v1697, %v1314
      %v1731 = vsel %vm1723, %v1698, %v1316
      %v1732 = vsel %vm1723, %v1699, %v1318
      %v1733 = vsel %vm1723, %v1700, %v1320
      %v1734 = vsel %vm1723, %v1701, %v1322
      %v1735 = vsel %vm1723, %v1702, %v1324
      %v1736 = vsel %vm1723, %v1703, %v1326
      %v1737 = vsel %vm1723, %v1704, %v1328
      %v1738 = vsel %vm1723, %v1705, %v1330
      %v1739 = vsel %vm1723, %v1706, %v1332
      %v1740 = vsel %vm1723, %v1707, %v1334
      %v1741 = vsel %vm1723, %v1708, %v1336
      %v1742 = vsel %vm1723, %v1709, %v1338
      %v1743 = vsel %vm1723, %v1710, %v1340
      %v1744 = vsel %vm1723, %v1711, %v1342
      %v1745 = vsel %vm1723, %v1712, %v1344
      %v1746 = vsel %vm1723, %v1713, %v1346
      %v1747 = vsel %vm1723, %v1714, %v1348
      %v1748 = vsel %vm1723, %v1715, %v1350
      %v1749 = vsel %vm1723, %v1716, %v1352
      %v1750 = vsel %vm1723, %v1717, %v1354
      %v1751 = vsel %vm1723, %v1718, %v1356
      %v1752 = vsel %vm1723, %v1719, %v1358
      %v1753 = vsel %vm1723, %v1720, %v1360
      %v1754 = vsel %vm1723, %v1721, %v1362
      %v1755 = vsel %vm1723, %v1722, %v1364
      %vm1756 = vcmask 261120
      %v1757 = vsel %vm1756, %v1724, %v1430
      %v1758 = vsel %vm1756, %v1725, %v1432
      %v1759 = vsel %vm1756, %v1726, %v1434
      %v1760 = vsel %vm1756, %v1727, %v1436
      %v1761 = vsel %vm1756, %v1728, %v1438
      %v1762 = vsel %vm1756, %v1729, %v1440
      %v1763 = vsel %vm1756, %v1730, %v1442
      %v1764 = vsel %vm1756, %v1731, %v1444
      %v1765 = vsel %vm1756, %v1732, %v1446
      %v1766 = vsel %vm1756, %v1733, %v1448
      %v1767 = vsel %vm1756, %v1734, %v1450
      %v1768 = vsel %vm1756, %v1735, %v1452
      %v1769 = vsel %vm1756, %v1736, %v1454
      %v1770 = vsel %vm1756, %v1737, %v1456
      %v1771 = vsel %vm1756, %v1738, %v1458
      %v1772 = vsel %vm1756, %v1739, %v1460
      %v1773 = vsel %vm1756, %v1740, %v1462
      %v1774 = vsel %vm1756, %v1741, %v1464
      %v1775 = vsel %vm1756, %v1742, %v1466
      %v1776 = vsel %vm1756, %v1743, %v1468
      %v1777 = vsel %vm1756, %v1744, %v1470
      %v1778 = vsel %vm1756, %v1745, %v1472
      %v1779 = vsel %vm1756, %v1746, %v1474
      %v1780 = vsel %vm1756, %v1747, %v1476
      %v1781 = vsel %vm1756, %v1748, %v1478
      %v1782 = vsel %vm1756, %v1749, %v1480
      %v1783 = vsel %vm1756, %v1750, %v1482
      %v1784 = vsel %vm1756, %v1751, %v1484
      %v1785 = vsel %vm1756, %v1752, %v1486
      %v1786 = vsel %vm1756, %v1753, %v1488
      %v1787 = vsel %vm1756, %v1754, %v1490
      %v1788 = vsel %vm1756, %v1755, %v1492
      %vm1789 = vcmask 293888
      %v1790 = vsel %vm1789, %v1757, 0.0
      %v1791 = vsel %vm1789, %v1758, 0.0
      %v1792 = vsel %vm1789, %v1759, 0.0
      %v1793 = vsel %vm1789, %v1760, 0.0
      %v1794 = vsel %vm1789, %v1761, 0.0
      %v1795 = vsel %vm1789, %v1762, 0.0
      %v1796 = vsel %vm1789, %v1763, 0.0
      %v1797 = vsel %vm1789, %v1764, 0.0
      %v1798 = vsel %vm1789, %v1765, 0.0
      %v1799 = vsel %vm1789, %v1766, 0.0
      %v1800 = vsel %vm1789, %v1767, 0.0
      %v1801 = vsel %vm1789, %v1768, 0.0
      %v1802 = vsel %vm1789, %v1769, 0.0
      %v1803 = vsel %vm1789, %v1770, 0.0
      %v1804 = vsel %vm1789, %v1771, 0.0
      %v1805 = vsel %vm1789, %v1772, 0.0
      %v1806 = vsel %vm1789, %v1773, 0.0
      %v1807 = vsel %vm1789, %v1774, 0.0
      %v1808 = vsel %vm1789, %v1775, 0.0
      %v1809 = vsel %vm1789, %v1776, 0.0
      %v1810 = vsel %vm1789, %v1777, 0.0
      %v1811 = vsel %vm1789, %v1778, 0.0
      %v1812 = vsel %vm1789, %v1779, 0.0
      %v1813 = vsel %vm1789, %v1780, 0.0
      %v1814 = vsel %vm1789, %v1781, 0.0
      %v1815 = vsel %vm1789, %v1782, 0.0
      %v1816 = vsel %vm1789, %v1783, 0.0
      %v1817 = vsel %vm1789, %v1784, 0.0
      %v1818 = vsel %vm1789, %v1785, 0.0
      %v1819 = vsel %vm1789, %v1786, 0.0
      %v1820 = vsel %vm1789, %v1787, 0.0
      %v1821 = vsel %vm1789, %v1788, 0.0
      %v1822 = vld [vmem:[%s1] sm:$0xff]
      %v1823 = vld [vmem:[%s1 + $0x8] sm:$0xff]
      %v1824 = vld [vmem:[%s1 + $0x10] sm:$0xff]
      %v1825 = vld [vmem:[%s1 + $0x18] sm:$0xff]
      %v1826 = vld [vmem:[%s1 + $0x20] sm:$0xff]
      %vm1827 = vcmask 326656
      %v1829 = vsel %vm1827, %v1790, 0
      %v1832 = vsel %vm1827, %v1791, 0
      %v1835 = vsel %vm1827, %v1792, 0
      %v1838 = vsel %vm1827, %v1793, 0
      %v1841 = vsel %vm1827, %v1794, 0
      %v1844 = vsel %vm1827, %v1795, 0
      %v1847 = vsel %vm1827, %v1796, 0
      %v1850 = vsel %vm1827, %v1797, 0
      %v1853 = vsel %vm1827, %v1798, 0
      %v1856 = vsel %vm1827, %v1799, 0
      %v1859 = vsel %vm1827, %v1800, 0
      %v1862 = vsel %vm1827, %v1801, 0
      %v1865 = vsel %vm1827, %v1802, 0
      %v1868 = vsel %vm1827, %v1803, 0
      %v1871 = vsel %vm1827, %v1804, 0
      %v1874 = vsel %vm1827, %v1805, 0
      %v1877 = vsel %vm1827, %v1806, 0
      %v1880 = vsel %vm1827, %v1807, 0
      %v1883 = vsel %vm1827, %v1808, 0
      %v1886 = vsel %vm1827, %v1809, 0
      %v1889 = vsel %vm1827, %v1810, 0
      %v1892 = vsel %vm1827, %v1811, 0
      %v1895 = vsel %vm1827, %v1812, 0
      %v1898 = vsel %vm1827, %v1813, 0
      %v1901 = vsel %vm1827, %v1814, 0
      %v1904 = vsel %vm1827, %v1815, 0
      %v1907 = vsel %vm1827, %v1816, 0
      %v1910 = vsel %vm1827, %v1817, 0
      %v1913 = vsel %vm1827, %v1818, 0
      %v1916 = vsel %vm1827, %v1819, 0
      %v1919 = vsel %vm1827, %v1820, 0
      %v1922 = vsel %vm1827, %v1821, 0
      %1924 = vmatprep.subr.mxu0 0.0
      %1925 = vmatpush1.msra.mxu0 0.0
      %1926 = vmatprep.subr.mxu0 0.0
      %1927 = vmatpush1.msra.mxu0 0.0
      %1928 = vmatprep.subr.mxu0 0.0
      %1929 = vmatpush1.msra.mxu0 0.0
      %1930 = vmatprep.subr.mxu0 0.0
      %1931 = vmatpush1.msra.mxu0 0.0
      %1932 = vmatprep.subr.mxu0 0.0
      %1933 = vmatpush1.msra.mxu0 0.0
      %1934 = vmatprep.subr.mxu0 0.0
      %1935 = vmatpush1.msra.mxu0 0.0
      %1936 = vmatprep.subr.mxu0 0.0
      %1937 = vmatpush1.msra.mxu0 0.0
      %1938 = vmatprep.subr.mxu0 0.0
      %1939 = vmatpush1.msra.mxu0 0.0
      %1940 = vmatprep.subr.mxu0 0.0
      %1941 = vmatpush1.msra.mxu0 0.0
      %1942 = vmatprep.subr.mxu0 0.0
      %1943 = vmatpush1.msra.mxu0 0.0
      %1944 = vmatprep.subr.mxu0 0.0
      %1945 = vmatpush1.msra.mxu0 0.0
      %1946 = vmatprep.subr.mxu0 0.0
      %1947 = vmatpush1.msra.mxu0 %v1826
      %1948 = vmatprep.subr.mxu0 0.0
      %1949 = vmatpush1.msra.mxu0 %v1825
      %1950 = vmatprep.subr.mxu0 0.0
      %1951 = vmatpush1.msra.mxu0 %v1824
      %1952 = vmatprep.subr.mxu0 0.0
      %1953 = vmatpush1.msra.mxu0 %v1823
      %1954 = vmatprep.subr.mxu0 0.0
      %1955 = vmatpush1.msra.mxu0 %v1822
      %1956 = vmatprep.subr.mxu0 0.0
      %1957 = vmatpush2.msra.mxu0 0.0
      %1958 = vmatprep.subr.mxu0 0.0
      %1959 = vmatpush2.msra.mxu0 0.0
      %1960 = vmatprep.subr.mxu0 0.0
      %1961 = vmatpush2.msra.mxu0 0.0
      %1962 = vmatprep.subr.mxu0 0.0
      %1963 = vmatpush2.msra.mxu0 0.0
      %1964 = vmatprep.subr.mxu0 0.0
      %1965 = vmatpush2.msra.mxu0 0.0
      %1966 = vmatprep.subr.mxu0 0.0
      %1967 = vmatpush2.msra.mxu0 0.0
      %1968 = vmatprep.subr.mxu0 0.0
      %1969 = vmatpush2.msra.mxu0 0.0
      %1970 = vmatprep.subr.mxu0 0.0
      %1971 = vmatpush2.msra.mxu0 0.0
      %1972 = vmatprep.subr.mxu0 0.0
      %1973 = vmatpush2.msra.mxu0 0.0
      %1974 = vmatprep.subr.mxu0 0.0
      %1975 = vmatpush2.msra.mxu0 0.0
      %1976 = vmatprep.subr.mxu0 0.0
      %1977 = vmatpush2.msra.mxu0 0.0
      %1978 = vmatprep.subr.mxu0 0.0
      %1979 = vmatpush2.msra.mxu0 0.0
      %1980 = vmatprep.subr.mxu0 0.0
      %1981 = vmatpush2.msra.mxu0 0.0
      %1982 = vmatprep.subr.mxu0 0.0
      %1983 = vmatpush2.msra.mxu0 0.0
      %1984 = vmatprep.subr.mxu0 0.0
      %1985 = vmatpush2.msra.mxu0 0.0
      %1986 = vmatprep.subr.mxu0 0.0
      %1987 = vmatpush2.msra.mxu0 0.0
      %1988 = vmatprep.mubr.f32.mxu0 0.0
      %1989 = vmatmul.mubr.f32.gmra.mxu0 %v1829
      %v1990 = vpop.f32.mrf.mxu0
      %v1991 = vadd.f32 0.0, %v1990
      %v1992 = vpop.f32.mrf.mxu0
      %1993 = vmatprep.mubr.f32.mxu0 0.0
      %1994 = vmatmul.mubr.f32.gmra.mxu0 %v1832
      %v1995 = vpop.f32.mrf.mxu0
      %v1996 = vadd.f32 0.0, %v1995
      %v1997 = vpop.f32.mrf.mxu0
      %1998 = vmatprep.mubr.f32.mxu0 0.0
      %1999 = vmatmul.mubr.f32.gmra.mxu0 %v1835
      %v2000 = vpop.f32.mrf.mxu0
      %v2001 = vadd.f32 0.0, %v2000
      %v2002 = vpop.f32.mrf.mxu0
      %2003 = vmatprep.mubr.f32.mxu0 0.0
      %2004 = vmatmul.mubr.f32.gmra.mxu0 %v1838
      %v2005 = vpop.f32.mrf.mxu0
      %v2006 = vadd.f32 0.0, %v2005
      %v2007 = vpop.f32.mrf.mxu0
      %2008 = vmatprep.mubr.f32.mxu0 0.0
      %2009 = vmatmul.mubr.f32.gmra.mxu0 %v1841
      %v2010 = vpop.f32.mrf.mxu0
      %v2011 = vadd.f32 0.0, %v2010
      %v2012 = vpop.f32.mrf.mxu0
      %2013 = vmatprep.mubr.f32.mxu0 0.0
      %2014 = vmatmul.mubr.f32.gmra.mxu0 %v1844
      %v2015 = vpop.f32.mrf.mxu0
      %v2016 = vadd.f32 0.0, %v2015
      %v2017 = vpop.f32.mrf.mxu0
      %2018 = vmatprep.mubr.f32.mxu0 0.0
      %2019 = vmatmul.mubr.f32.gmra.mxu0 %v1847
      %v2020 = vpop.f32.mrf.mxu0
      %v2021 = vadd.f32 0.0, %v2020
      %v2022 = vpop.f32.mrf.mxu0
      %2023 = vmatprep.mubr.f32.mxu0 0.0
      %2024 = vmatmul.mubr.f32.gmra.mxu0 %v1850
      %v2025 = vpop.f32.mrf.mxu0
      %v2026 = vadd.f32 0.0, %v2025
      %v2027 = vpop.f32.mrf.mxu0
      %2028 = vmatprep.mubr.f32.mxu0 0.0
      %2029 = vmatmul.mubr.f32.gmra.mxu0 %v1853
      %v2030 = vpop.f32.mrf.mxu0
      %v2031 = vadd.f32 0.0, %v2030
      %v2032 = vpop.f32.mrf.mxu0
      %2033 = vmatprep.mubr.f32.mxu0 0.0
      %2034 = vmatmul.mubr.f32.gmra.mxu0 %v1856
      %v2035 = vpop.f32.mrf.mxu0
      %v2036 = vadd.f32 0.0, %v2035
      %v2037 = vpop.f32.mrf.mxu0
      %2038 = vmatprep.mubr.f32.mxu0 0.0
      %2039 = vmatmul.mubr.f32.gmra.mxu0 %v1859
      %v2040 = vpop.f32.mrf.mxu0
      %v2041 = vadd.f32 0.0, %v2040
      %v2042 = vpop.f32.mrf.mxu0
      %2043 = vmatprep.mubr.f32.mxu0 0.0
      %2044 = vmatmul.mubr.f32.gmra.mxu0 %v1862
      %v2045 = vpop.f32.mrf.mxu0
      %v2046 = vadd.f32 0.0, %v2045
      %v2047 = vpop.f32.mrf.mxu0
      %2048 = vmatprep.mubr.f32.mxu0 0.0
      %2049 = vmatmul.mubr.f32.gmra.mxu0 %v1865
      %v2050 = vpop.f32.mrf.mxu0
      %v2051 = vadd.f32 0.0, %v2050
      %v2052 = vpop.f32.mrf.mxu0
      %2053 = vmatprep.mubr.f32.mxu0 0.0
      %2054 = vmatmul.mubr.f32.gmra.mxu0 %v1868
      %v2055 = vpop.f32.mrf.mxu0
      %v2056 = vadd.f32 0.0, %v2055
      %v2057 = vpop.f32.mrf.mxu0
      %2058 = vmatprep.mubr.f32.mxu0 0.0
      %2059 = vmatmul.mubr.f32.gmra.mxu0 %v1871
      %v2060 = vpop.f32.mrf.mxu0
      %v2061 = vadd.f32 0.0, %v2060
      %v2062 = vpop.f32.mrf.mxu0
      %2063 = vmatprep.mubr.f32.mxu0 0.0
      %2064 = vmatmul.mubr.f32.gmra.mxu0 %v1874
      %v2065 = vpop.f32.mrf.mxu0
      %v2066 = vadd.f32 0.0, %v2065
      %v2067 = vpop.f32.mrf.mxu0
      %2068 = vmatprep.mubr.f32.mxu0 0.0
      %2069 = vmatmul.mubr.f32.gmra.mxu0 %v1877
      %v2070 = vpop.f32.mrf.mxu0
      %v2071 = vadd.f32 0.0, %v2070
      %v2072 = vpop.f32.mrf.mxu0
      %2073 = vmatprep.mubr.f32.mxu0 0.0
      %2074 = vmatmul.mubr.f32.gmra.mxu0 %v1880
      %v2075 = vpop.f32.mrf.mxu0
      %v2076 = vadd.f32 0.0, %v2075
      %v2077 = vpop.f32.mrf.mxu0
      %2078 = vmatprep.mubr.f32.mxu0 0.0
      %2079 = vmatmul.mubr.f32.gmra.mxu0 %v1883
      %v2080 = vpop.f32.mrf.mxu0
      %v2081 = vadd.f32 0.0, %v2080
      %v2082 = vpop.f32.mrf.mxu0
      %2083 = vmatprep.mubr.f32.mxu0 0.0
      %2084 = vmatmul.mubr.f32.gmra.mxu0 %v1886
      %v2085 = vpop.f32.mrf.mxu0
      %v2086 = vadd.f32 0.0, %v2085
      %v2087 = vpop.f32.mrf.mxu0
      %2088 = vmatprep.mubr.f32.mxu0 0.0
      %2089 = vmatmul.mubr.f32.gmra.mxu0 %v1889
      %v2090 = vpop.f32.mrf.mxu0
      %v2091 = vadd.f32 0.0, %v2090
      %v2092 = vpop.f32.mrf.mxu0
      %2093 = vmatprep.mubr.f32.mxu0 0.0
      %2094 = vmatmul.mubr.f32.gmra.mxu0 %v1892
      %v2095 = vpop.f32.mrf.mxu0
      %v2096 = vadd.f32 0.0, %v2095
      %v2097 = vpop.f32.mrf.mxu0
      %2098 = vmatprep.mubr.f32.mxu0 0.0
      %2099 = vmatmul.mubr.f32.gmra.mxu0 %v1895
      %v2100 = vpop.f32.mrf.mxu0
      %v2101 = vadd.f32 0.0, %v2100
      %v2102 = vpop.f32.mrf.mxu0
      %2103 = vmatprep.mubr.f32.mxu0 0.0
      %2104 = vmatmul.mubr.f32.gmra.mxu0 %v1898
      %v2105 = vpop.f32.mrf.mxu0
      %v2106 = vadd.f32 0.0, %v2105
      %v2107 = vpop.f32.mrf.mxu0
      %2108 = vmatprep.mubr.f32.mxu0 0.0
      %2109 = vmatmul.mubr.f32.gmra.mxu0 %v1901
      %v2110 = vpop.f32.mrf.mxu0
      %v2111 = vadd.f32 0.0, %v2110
      %v2112 = vpop.f32.mrf.mxu0
      %2113 = vmatprep.mubr.f32.mxu0 0.0
      %2114 = vmatmul.mubr.f32.gmra.mxu0 %v1904
      %v2115 = vpop.f32.mrf.mxu0
      %v2116 = vadd.f32 0.0, %v2115
      %v2117 = vpop.f32.mrf.mxu0
      %2118 = vmatprep.mubr.f32.mxu0 0.0
      %2119 = vmatmul.mubr.f32.gmra.mxu0 %v1907
      %v2120 = vpop.f32.mrf.mxu0
      %v2121 = vadd.f32 0.0, %v2120
      %v2122 = vpop.f32.mrf.mxu0
      %2123 = vmatprep.mubr.f32.mxu0 0.0
      %2124 = vmatmul.mubr.f32.gmra.mxu0 %v1910
      %v2125 = vpop.f32.mrf.mxu0
      %v2126 = vadd.f32 0.0, %v2125
      %v2127 = vpop.f32.mrf.mxu0
      %2128 = vmatprep.mubr.f32.mxu0 0.0
      %2129 = vmatmul.mubr.f32.gmra.mxu0 %v1913
      %v2130 = vpop.f32.mrf.mxu0
      %v2131 = vadd.f32 0.0, %v2130
      %v2132 = vpop.f32.mrf.mxu0
      %2133 = vmatprep.mubr.f32.mxu0 0.0
      %2134 = vmatmul.mubr.f32.gmra.mxu0 %v1916
      %v2135 = vpop.f32.mrf.mxu0
      %v2136 = vadd.f32 0.0, %v2135
      %v2137 = vpop.f32.mrf.mxu0
      %2138 = vmatprep.mubr.f32.mxu0 0.0
      %2139 = vmatmul.mubr.f32.gmra.mxu0 %v1919
      %v2140 = vpop.f32.mrf.mxu0
      %v2141 = vadd.f32 0.0, %v2140
      %v2142 = vpop.f32.mrf.mxu0
      %2143 = vmatprep.mubr.f32.mxu0 0.0
      %2144 = vmatmul.mubr.f32.gmra.mxu0 %v1922
      %v2145 = vpop.f32.mrf.mxu0
      %v2146 = vadd.f32 0.0, %v2145
      %v2147 = vpop.f32.mrf.mxu0
      %2148 = vdwg.mxu0
      %2149 = vst.msk [vmem:[%s196] sm:$0xff] %vm1558, %v1991
      %2150 = vst.msk [vmem:[%s196 + $0x8] sm:$0xff] %vm1558, %v1996
      %2151 = vst.msk [vmem:[%s196 + $0x10] sm:$0xff] %vm1558, %v2001
      %2152 = vst.msk [vmem:[%s196 + $0x18] sm:$0xff] %vm1558, %v2006
      %2153 = vst.msk [vmem:[%s196 + $0x20] sm:$0xff] %vm1558, %v2011
      %2154 = vst.msk [vmem:[%s196 + $0x28] sm:$0xff] %vm1558, %v2016
      %2155 = vst.msk [vmem:[%s196 + $0x30] sm:$0xff] %vm1558, %v2021
      %2156 = vst.msk [vmem:[%s196 + $0x38] sm:$0xff] %vm1558, %v2026
      %2157 = vst.msk [vmem:[%s196 + $0x40] sm:$0xff] %vm1558, %v2031
      %2158 = vst.msk [vmem:[%s196 + $0x48] sm:$0xff] %vm1558, %v2036
      %2159 = vst.msk [vmem:[%s196 + $0x50] sm:$0xff] %vm1558, %v2041
      %2160 = vst.msk [vmem:[%s196 + $0x58] sm:$0xff] %vm1558, %v2046
      %2161 = vst.msk [vmem:[%s196 + $0x60] sm:$0xff] %vm1558, %v2051
      %2162 = vst.msk [vmem:[%s196 + $0x68] sm:$0xff] %vm1558, %v2056
      %2163 = vst.msk [vmem:[%s196 + $0x70] sm:$0xff] %vm1558, %v2061
      %2164 = vst.msk [vmem:[%s196 + $0x78] sm:$0xff] %vm1558, %v2066
      %2165 = vst.msk [vmem:[%s196 + $0x80] sm:$0xff] %vm1558, %v2071
      %2166 = vst.msk [vmem:[%s196 + $0x88] sm:$0xff] %vm1558, %v2076
      %2167 = vst.msk [vmem:[%s196 + $0x90] sm:$0xff] %vm1558, %v2081
      %2168 = vst.msk [vmem:[%s196 + $0x98] sm:$0xff] %vm1558, %v2086
      %2169 = vst.msk [vmem:[%s196 + $0xa0] sm:$0xff] %vm1558, %v2091
      %2170 = vst.msk [vmem:[%s196 + $0xa8] sm:$0xff] %vm1558, %v2096
      %2171 = vst.msk [vmem:[%s196 + $0xb0] sm:$0xff] %vm1558, %v2101
      %2172 = vst.msk [vmem:[%s196 + $0xb8] sm:$0xff] %vm1558, %v2106
      %2173 = vst.msk [vmem:[%s196 + $0xc0] sm:$0xff] %vm1558, %v2111
      %2174 = vst.msk [vmem:[%s196 + $0xc8] sm:$0xff] %vm1558, %v2116
      %2175 = vst.msk [vmem:[%s196 + $0xd0] sm:$0xff] %vm1558, %v2121
      %2176 = vst.msk [vmem:[%s196 + $0xd8] sm:$0xff] %vm1558, %v2126
      %2177 = vst.msk [vmem:[%s196 + $0xe0] sm:$0xff] %vm1558, %v2131
      %2178 = vst.msk [vmem:[%s196 + $0xe8] sm:$0xff] %vm1558, %v2136
      %2179 = vst.msk [vmem:[%s196 + $0xf0] sm:$0xff] %vm1558, %v2141
      %2180 = vst.msk [vmem:[%s196 + $0xf8] sm:$0xff] %vm1558, %v2146
      %v2181 = vsel %vm1558, %v1991, 0.0
      %v2182 = vsel %vm1558, %v1996, 0.0
      %v2183 = vadd.f32 %v2181, %v2182
      %v2184 = vsel %vm1558, %v2001, 0.0
      %v2185 = vadd.f32 %v2183, %v2184
      %v2186 = vsel %vm1558, %v2006, 0.0
      %v2187 = vadd.f32 %v2185, %v2186
      %v2188 = vsel %vm1558, %v2011, 0.0
      %v2189 = vadd.f32 %v2187, %v2188
      %v2190 = vsel %vm1558, %v2016, 0.0
      %v2191 = vadd.f32 %v2189, %v2190
      %v2192 = vsel %vm1558, %v2021, 0.0
      %v2193 = vadd.f32 %v2191, %v2192
      %v2194 = vsel %vm1558, %v2026, 0.0
      %v2195 = vadd.f32 %v2193, %v2194
      %v2196 = vsel %vm1558, %v2031, 0.0
      %v2197 = vadd.f32 %v2195, %v2196
      %v2198 = vsel %vm1558, %v2036, 0.0
      %v2199 = vadd.f32 %v2197, %v2198
      %v2200 = vsel %vm1558, %v2041, 0.0
      %v2201 = vadd.f32 %v2199, %v2200
      %v2202 = vsel %vm1558, %v2046, 0.0
      %v2203 = vadd.f32 %v2201, %v2202
      %v2204 = vsel %vm1558, %v2051, 0.0
      %v2205 = vadd.f32 %v2203, %v2204
      %v2206 = vsel %vm1558, %v2056, 0.0
      %v2207 = vadd.f32 %v2205, %v2206
      %v2208 = vsel %vm1558, %v2061, 0.0
      %v2209 = vadd.f32 %v2207, %v2208
      %v2210 = vsel %vm1558, %v2066, 0.0
      %v2211 = vadd.f32 %v2209, %v2210
      %v2212 = vsel %vm1558, %v2071, 0.0
      %v2213 = vadd.f32 %v2211, %v2212
      %v2214 = vsel %vm1558, %v2076, 0.0
      %v2215 = vadd.f32 %v2213, %v2214
      %v2216 = vsel %vm1558, %v2081, 0.0
      %v2217 = vadd.f32 %v2215, %v2216
      %v2218 = vsel %vm1558, %v2086, 0.0
      %v2219 = vadd.f32 %v2217, %v2218
      %v2220 = vsel %vm1558, %v2091, 0.0
      %v2221 = vadd.f32 %v2219, %v2220
      %v2222 = vsel %vm1558, %v2096, 0.0
      %v2223 = vadd.f32 %v2221, %v2222
      %v2224 = vsel %vm1558, %v2101, 0.0
      %v2225 = vadd.f32 %v2223, %v2224
      %v2226 = vsel %vm1558, %v2106, 0.0
      %v2227 = vadd.f32 %v2225, %v2226
      %v2228 = vsel %vm1558, %v2111, 0.0
      %v2229 = vadd.f32 %v2227, %v2228
      %v2230 = vsel %vm1558, %v2116, 0.0
      %v2231 = vadd.f32 %v2229, %v2230
      %v2232 = vsel %vm1558, %v2121, 0.0
      %v2233 = vadd.f32 %v2231, %v2232
      %v2234 = vsel %vm1558, %v2126, 0.0
      %v2235 = vadd.f32 %v2233, %v2234
      %v2236 = vsel %vm1558, %v2131, 0.0
      %v2237 = vadd.f32 %v2235, %v2236
      %v2238 = vsel %vm1558, %v2136, 0.0
      %v2239 = vadd.f32 %v2237, %v2238
      %v2240 = vsel %vm1558, %v2141, 0.0
      %v2241 = vadd.f32 %v2239, %v2240
      %v2242 = vsel %vm1558, %v2146, 0.0
      %v2243 = vadd.f32 %v2241, %v2242
      %v2244 = vrot.slane %v2243, 4
      %v2245 = vadd.f32 %v2243, %v2244
      %v2246 = vrot.slane %v2245, 2
      %v2247 = vadd.f32 %v2245, %v2246
      %v2248 = vrot.slane %v2247, 1
      %v2249 = vadd.f32 %v2247, %v2248
      %vm2250 = vcmask 57344
      %2251 = vst.msk [vmem:[%s202] sm:$0x1] %vm2250, %v2249
      %v2252 = vmul.f32 %v1991, %v1991
      %v2253 = vmul.f32 %v1996, %v1996
      %v2254 = vmul.f32 %v2001, %v2001
      %v2255 = vmul.f32 %v2006, %v2006
      %v2256 = vmul.f32 %v2011, %v2011
      %v2257 = vmul.f32 %v2016, %v2016
      %v2258 = vmul.f32 %v2021, %v2021
      %v2259 = vmul.f32 %v2026, %v2026
      %v2260 = vmul.f32 %v2031, %v2031
      %v2261 = vmul.f32 %v2036, %v2036
      %v2262 = vmul.f32 %v2041, %v2041
      %v2263 = vmul.f32 %v2046, %v2046
      %v2264 = vmul.f32 %v2051, %v2051
      %v2265 = vmul.f32 %v2056, %v2056
      %v2266 = vmul.f32 %v2061, %v2061
      %v2267 = vmul.f32 %v2066, %v2066
      %v2268 = vmul.f32 %v2071, %v2071
      %v2269 = vmul.f32 %v2076, %v2076
      %v2270 = vmul.f32 %v2081, %v2081
      %v2271 = vmul.f32 %v2086, %v2086
      %v2272 = vmul.f32 %v2091, %v2091
      %v2273 = vmul.f32 %v2096, %v2096
      %v2274 = vmul.f32 %v2101, %v2101
      %v2275 = vmul.f32 %v2106, %v2106
      %v2276 = vmul.f32 %v2111, %v2111
      %v2277 = vmul.f32 %v2116, %v2116
      %v2278 = vmul.f32 %v2121, %v2121
      %v2279 = vmul.f32 %v2126, %v2126
      %v2280 = vmul.f32 %v2131, %v2131
      %v2281 = vmul.f32 %v2136, %v2136
      %v2282 = vmul.f32 %v2141, %v2141
      %v2283 = vmul.f32 %v2146, %v2146
      %v2284 = vsel %vm1558, %v2252, 0.0
      %v2285 = vsel %vm1558, %v2253, 0.0
      %v2286 = vadd.f32 %v2284, %v2285
      %v2287 = vsel %vm1558, %v2254, 0.0
      %v2288 = vadd.f32 %v2286, %v2287
      %v2289 = vsel %vm1558, %v2255, 0.0
      %v2290 = vadd.f32 %v2288, %v2289
      %v2291 = vsel %vm1558, %v2256, 0.0
      %v2292 = vadd.f32 %v2290, %v2291
      %v2293 = vsel %vm1558, %v2257, 0.0
      %v2294 = vadd.f32 %v2292, %v2293
      %v2295 = vsel %vm1558, %v2258, 0.0
      %v2296 = vadd.f32 %v2294, %v2295
      %v2297 = vsel %vm1558, %v2259, 0.0
      %v2298 = vadd.f32 %v2296, %v2297
      %v2299 = vsel %vm1558, %v2260, 0.0
      %v2300 = vadd.f32 %v2298, %v2299
      %v2301 = vsel %vm1558, %v2261, 0.0
      %v2302 = vadd.f32 %v2300, %v2301
      %v2303 = vsel %vm1558, %v2262, 0.0
      %v2304 = vadd.f32 %v2302, %v2303
      %v2305 = vsel %vm1558, %v2263, 0.0
      %v2306 = vadd.f32 %v2304, %v2305
      %v2307 = vsel %vm1558, %v2264, 0.0
      %v2308 = vadd.f32 %v2306, %v2307
      %v2309 = vsel %vm1558, %v2265, 0.0
      %v2310 = vadd.f32 %v2308, %v2309
      %v2311 = vsel %vm1558, %v2266, 0.0
      %v2312 = vadd.f32 %v2310, %v2311
      %v2313 = vsel %vm1558, %v2267, 0.0
      %v2314 = vadd.f32 %v2312, %v2313
      %v2315 = vsel %vm1558, %v2268, 0.0
      %v2316 = vadd.f32 %v2314, %v2315
      %v2317 = vsel %vm1558, %v2269, 0.0
      %v2318 = vadd.f32 %v2316, %v2317
      %v2319 = vsel %vm1558, %v2270, 0.0
      %v2320 = vadd.f32 %v2318, %v2319
      %v2321 = vsel %vm1558, %v2271, 0.0
      %v2322 = vadd.f32 %v2320, %v2321
      %v2323 = vsel %vm1558, %v2272, 0.0
      %v2324 = vadd.f32 %v2322, %v2323
      %v2325 = vsel %vm1558, %v2273, 0.0
      %v2326 = vadd.f32 %v2324, %v2325
      %v2327 = vsel %vm1558, %v2274, 0.0
      %v2328 = vadd.f32 %v2326, %v2327
      %v2329 = vsel %vm1558, %v2275, 0.0
      %v2330 = vadd.f32 %v2328, %v2329
      %v2331 = vsel %vm1558, %v2276, 0.0
      %v2332 = vadd.f32 %v2330, %v2331
      %v2333 = vsel %vm1558, %v2277, 0.0
      %v2334 = vadd.f32 %v2332, %v2333
      %v2335 = vsel %vm1558, %v2278, 0.0
      %v2336 = vadd.f32 %v2334, %v2335
      %v2337 = vsel %vm1558, %v2279, 0.0
      %v2338 = vadd.f32 %v2336, %v2337
      %v2339 = vsel %vm1558, %v2280, 0.0
      %v2340 = vadd.f32 %v2338, %v2339
      %v2341 = vsel %vm1558, %v2281, 0.0
      %v2342 = vadd.f32 %v2340, %v2341
      %v2343 = vsel %vm1558, %v2282, 0.0
      %v2344 = vadd.f32 %v2342, %v2343
      %v2345 = vsel %vm1558, %v2283, 0.0
      %v2346 = vadd.f32 %v2344, %v2345
      %v2347 = vrot.slane %v2346, 4
      %v2348 = vadd.f32 %v2346, %v2347
      %v2349 = vrot.slane %v2348, 2
      %v2350 = vadd.f32 %v2348, %v2349
      %v2351 = vrot.slane %v2350, 1
      %v2352 = vadd.f32 %v2350, %v2351
      %2353 = vst.msk [vmem:[%s202 + $0x1] sm:$0x1] %vm2250, %v2352
      %s2354 = sadd.s32 %s19, %s20
      %p2355 = scmp.lt.s32.totalorder %s2354, 1
      %s2356 = scalar_select %p2355, %s2354, 1
      %s2357 = smul.addr %s2356, 32
      %s2358 = smul.addr %s2357, 8
      %s2359 = scalar_lea.vmem %s2, %s2358
      %s2360 = sadd.s32 %s19, %s20
      %p2361 = scmp.lt.s32.totalorder %s2360, 1
      %s2362 = scalar_select %p2361, %s2360, 1
      %s2363 = smul.addr %s2362, 2
      %s2364 = scalar_lea.vmem %s3, %s2363
      // Predicated region
      $region29: #{conv_bn_relu.2} parent=27 // pred_check
        %p2365 = pneg %p94
      $region30: #{conv_bn_relu.2} parent=27 // pred_check_branch
        %2367 = sbr.rel (%p2365) target = $region32
      $region31: #{conv_bn_relu.2} parent=27 // pred_region
        %s2368 = sadd.s32 %s19, %s20
      $region32: #{conv_bn_relu.2} parent=27 // pred_fallthru
        _
      // Predicated region
      $region33: #{conv_bn_relu.2} parent=27 // pred_check
        %p2369 = pneg %p122
      $region34: #{conv_bn_relu.2} parent=27 // pred_check_branch
        %2371 = sbr.rel (%p2369) target = $region36
      $region35: #{conv_bn_relu.2} parent=27 // pred_region
        %s2372 = sadd.s32 %s19, %s20
      $region36: #{conv_bn_relu.2} parent=27 // pred_fallthru
        _
    $region28: #{conv_bn_relu.2} parent=5 // pred_fallthru
      _
    %p2373 = scmp.le.s32.totalorder 2, %s10
    // Predicated region
    $region37: #{conv_bn_relu.2} parent=5 // pred_check
      %p2374 = pneg %p2373
    $region38: #{conv_bn_relu.2} parent=5 // pred_check_branch
      %2376 = sbr.rel (%p2374) target = $region40
    $region39: #{conv_bn_relu.2} parent=5 // pred_region
      %s2377 = ssub.s32 %s10, 2
      // Predicated region
      $region41: #{conv_bn_relu.2} parent=39 // pred_check
        %p2378 = pneg %p100
      $region42: #{conv_bn_relu.2} parent=39 // pred_check_branch
        %2380 = sbr.rel (%p2378) target = $region44
      $region43: #{conv_bn_relu.2} parent=39 // pred_region
        %s2381 = sadd.s32 %s21, %s22
        %p2382 = scmp.lt.s32.totalorder %s2381, 1
        %s2383 = scalar_select %p2382, %s2381, 1
        %s2384 = smul.addr %s2383, 32
        %s2385 = smul.addr %s2384, 8
        %s2386 = scalar_lea.vmem %s2, %s2385
      $region44: #{conv_bn_relu.2} parent=39 // pred_fallthru
        _
      // Predicated region
      $region45: #{conv_bn_relu.2} parent=39 // pred_check
        %p2387 = pneg %p128
      $region46: #{conv_bn_relu.2} parent=39 // pred_check_branch
        %2389 = sbr.rel (%p2387) target = $region48
      $region47: #{conv_bn_relu.2} parent=39 // pred_region
        %s2390 = sadd.s32 %s21, %s22
        %p2391 = scmp.lt.s32.totalorder %s2390, 1
        %s2392 = scalar_select %p2391, %s2390, 1
        %s2393 = smul.addr %s2392, 2
        %s2394 = scalar_lea.vmem %s3, %s2393
      $region48: #{conv_bn_relu.2} parent=39 // pred_fallthru
        _
    $region40: #{conv_bn_relu.2} parent=5 // pred_fallthru
      _
  $region6: #{conv_bn_relu.2} parent=0 // loop_footer
    %s14 = sadd.s32 1, %s10
  $region7: #{conv_bn_relu.2} parent=0 // loop_footer_branch
    %9 = sbr.rel target = $region3
  $region8: #{conv_bn_relu.2} parent=0 // loop_exit
    _

</llo_original>
